<compile_context>
chip_gen: v7x
topology: tpu7x:2x2x1
jax: 0.10.0
libtpu: 0.0.40
codegen_flags: <defaults>
</compile_context>

<pallas_src>
import math

import jax
import jax.numpy as jnp
from jax.experimental import pallas as pl
from jax.experimental.pallas import tpu as pltpu


# ----------------------------------------------------------------------------
# Config (small synthetic shapes, consistent with the PyTorch module)
# ----------------------------------------------------------------------------
CFG = dict(
    vocab_size=128,
    context_length=16,
    emb_dim=64,
    n_heads=4,
    n_kv_groups=2,
    hidden_dim=128,          # FeedForward hidden size
    n_layers=2,
    rope_base=10000.0,
    rope_freq=None,
    dtype=jnp.bfloat16,      # matches the hard-coded .to(torch.bfloat16) casts
)
EPS = 1e-5


# ----------------------------------------------------------------------------
# RoPE precompute (plain JAX glue, mirrors precompute_rope_params)
# ----------------------------------------------------------------------------
def precompute_rope_params(head_dim, theta_base=10000.0, context_length=4096,
                           freq_config=None):
    assert head_dim % 2 == 0, "Embedding dimension must be even"
    inv_freq = 1.0 / theta_base ** (jnp.arange(0, head_dim, 2, dtype=jnp.float32)
                                    / head_dim)
    if freq_config:
        low_freq_wavelen = (freq_config["original_context_length"]
                            / freq_config["low_freq_factor"])
        high_freq_wavelen = (freq_config["original_context_length"]
                             / freq_config["high_freq_factor"])
        wavelen = 2 * jnp.pi / inv_freq
        inv_freq_adjusted = jnp.where(wavelen > low_freq_wavelen,
                                      inv_freq / freq_config["factor"], inv_freq)
        smooth_factor = ((freq_config["original_context_length"] / wavelen
                          - freq_config["low_freq_factor"])
                         / (freq_config["high_freq_factor"]
                            - freq_config["low_freq_factor"]))
        smoothed = ((1 - smooth_factor) * (inv_freq / freq_config["factor"])
                    + smooth_factor * inv_freq)
        is_medium = (wavelen <= low_freq_wavelen) & (wavelen >= high_freq_wavelen)
        inv_freq = jnp.where(is_medium, smoothed, inv_freq_adjusted)

    positions = jnp.arange(context_length, dtype=jnp.float32)
    angles = positions[:, None] * inv_freq[None, :]
    angles = jnp.concatenate([angles, angles], axis=1)        # (ctx, head_dim)
    return jnp.cos(angles), jnp.sin(angles)


# ----------------------------------------------------------------------------
# Fused whole-model Pallas kernel (grid = (n_layers,), whole batch per step)
# ----------------------------------------------------------------------------
def make_fused_kernel(B, T, num_heads, num_kv_groups, head_dim, hidden_dim):
    H, G, hd, HFF = num_heads, num_kv_groups, head_dim, hidden_dim
    gs = H // G                      # group_size (repeat_interleave factor)
    M = B * T                        # fat GEMM M dimension
    D = H * hd
    kvD = G * hd

    def kernel(x_ref, cos_ref, sin_ref, mask_ref,
               n1_ref, wqkv_ref, wo_ref, n2_ref, w12_ref, w3_ref,
               nf_ref, wout_ref, o_ref, x_vmem):
        f32, bf16 = jnp.float32, jnp.bfloat16
        layer = pl.program_id(0)
        n_layers = pl.num_programs(0)

        # Load the token embeddings into the resident activation scratch once;
        # they stay in VMEM across the (sequential) layer axis.
        @pl.when(layer == 0)
        def _():
            x_vmem[...] = x_ref[...].astype(f32)

        x = x_vmem[...]                                       # (M, D) f32

        def rmsnorm_bf16(v, w):                               # w: (1, D) f32
            ms = jnp.mean(v * v, axis=-1, keepdims=True)
            return (v * jax.lax.rsqrt(ms + EPS) * w).astype(bf16)

        # ---------------- grouped-query attention ----------------
        xn = rmsnorm_bf16(x, n1_ref[0])
        # One fat fused projection: [Q | Q_rot | K | K_rot | V].  The
        # rotate-half column permutation and the 1/sqrt(head_dim) scale are
        # folded into the weights at init, so RoPE below is pure VPU work.
        qkv = jnp.dot(xn, wqkv_ref[0], preferred_element_type=f32)  # (M, 2D+3kvD)

        cos = cos_ref[...]           # (M, D) f32, tiled over batch & heads
        sin = sin_ref[...]           # (M, D) f32, rotate-half sign pre-folded

        q = qkv[:, :D] * cos + qkv[:, D:2 * D] * sin                    # (M, D)
        k = (qkv[:, 2 * D:2 * D + kvD] * cos[:, :kvD]
             + qkv[:, 2 * D + kvD:2 * D + 2 * kvD] * sin[:, :kvD])      # (M, kvD)
        v = qkv[:, 2 * D + 2 * kvD:]                                    # (M, kvD)

        q = q.astype(bf16)
        k = k.astype(bf16)
        v = v.astype(bf16)

        # GQA without materializing the head repeat:
        #   Q: (B*G, gs*T, hd)     K, V: (B*G, T, hd)
        q_bg = jnp.stack(
            [jnp.concatenate(
                [q[:, (g * gs + c) * hd:(g * gs + c + 1) * hd].reshape(B, T, hd)
                 for c in range(gs)], axis=1)
             for g in range(G)], axis=1).reshape(B * G, gs * T, hd)
        k_bg = jnp.stack(
            [k[:, g * hd:(g + 1) * hd].reshape(B, T, hd) for g in range(G)],
            axis=1).reshape(B * G, T, hd)
        v_bg = jnp.stack(
            [v[:, g * hd:(g + 1) * hd].reshape(B, T, hd) for g in range(G)],
            axis=1).reshape(B * G, T, hd)

        # Scores / softmax kept in f32 (mask add + max-subtract must be f32).
        s = jnp.einsum("nqd,nkd->nqk", q_bg, k_bg,
                       preferred_element_type=f32)            # (B*G, gs*T, T)
        s = s + mask_ref[...]                     # additive causal mask
        s = s - jnp.max(s, axis=-1, keepdims=True)
        p = jnp.exp(s)
        p = p * pl.reciprocal(jnp.sum(p, axis=-1, keepdims=True), approx=True)
        ctx = jnp.einsum("nqk,nkd->nqd", p.astype(bf16), v_bg,
                         preferred_element_type=f32)          # (B*G, gs*T, hd)
        ctx = ctx.reshape(B, G, gs, T, hd)

        # Output projection accumulated over heads on the MXU (no lane concat).
        wo = wo_ref[0]                                        # (D, D) bf16
        att = None
        for g in range(G):
            for c in range(gs):
                h = g * gs + c
                ctx_h = ctx[:, g, c].reshape(M, hd).astype(bf16)
                contrib = jnp.dot(ctx_h, wo[h * hd:(h + 1) * hd, :],
                                  preferred_element_type=f32)
                att = contrib if att is None else att + contrib
        x = x + att

        # ---------------- SwiGLU feed-forward ----------------
        xn2 = rmsnorm_bf16(x, n2_ref[0])
        h12 = jnp.dot(xn2, w12_ref[0], preferred_element_type=f32)   # (M, 2*HFF)
        # bf16 elementwise chain (native on v6e/v7x VPU/EUP).
        # TODO(synk): keep this chain in f32 on v5e (no bf16 VALU/EUP there).
        h1 = h12[:, :HFF].astype(bf16)
        h2 = h12[:, HFF:].astype(bf16)
        act = h1 * jax.nn.sigmoid(h1) * h2
        x = x + jnp.dot(act, w3_ref[0], preferred_element_type=f32)

        x_vmem[...] = x

        # ---------------- final RMSNorm + LM head (last layer only) --------
        @pl.when(layer == n_layers - 1)
        def _():
            xf = rmsnorm_bf16(x, nf_ref[...])
            o_ref[...] = jnp.dot(xf, wout_ref[...],
                                 preferred_element_type=f32).astype(o_ref.dtype)

    return kernel


# ----------------------------------------------------------------------------
# Wrapper (pallas_call plumbing)
# ----------------------------------------------------------------------------
def llama3_forward(params, in_idx, cfg):
    # token embedding lookup (gather) -- plain JAX glue outside the kernel
    x = jnp.take(params["tok_emb"], in_idx, axis=0)           # (B, T, D) bf16
    B, T, D = x.shape
    H, G = cfg["n_heads"], cfg["n_kv_groups"]
    hd = D // H
    gs = H // G
    HFF = cfg["hidden_dim"]
    L = cfg["n_layers"]
    V = params["out_head"].shape[1]
    M = B * T

    x2d = x.reshape(M, D)                                     # fat-M layout

    # Full-width (M, D) cos / signed-sin, tiled over batch rows and heads.
    cos = jnp.tile(params["rope_cos"][:T], (B, H))            # (M, D) f32
    sin = jnp.tile(params["rope_sin_signed"][:T], (B, H))     # (M, D) f32

    # Additive causal mask pre-tiled for the grouped (gs*T, T) score block.
    t = jnp.arange(T)
    causal = jnp.where(t[None, :] > t[:, None], -1e30, 0.0).astype(jnp.float32)
    mask_add = jnp.tile(causal, (gs, 1))                      # (gs*T, T)

    def full(a):
        # Grid-invariant block: DMA'd once, stays resident across layers.
        # TODO(synk): mark pipeline_mode=pl.Buffered(1) to reclaim the second
        # pipeline buffer on v7x (64 MiB VMEM) at real sizes.
        nd = a.ndim
        return pl.BlockSpec(a.shape, lambda l, nd=nd: (0,) * nd)

    def per_layer(a):
        nd = a.ndim
        return pl.BlockSpec((1,) + a.shape[1:],
                            lambda l, nd=nd: (l,) + (0,) * (nd - 1))

    kernel = make_fused_kernel(B, T, H, G, hd, HFF)

    out = pl.pallas_call(
        kernel,
        out_shape=jax.ShapeDtypeStruct((M, V), x.dtype),      # 128-lane dense
        grid=(L,),
        in_specs=[
            full(x2d), full(cos), full(sin), full(mask_add),
            per_layer(params["norm1"]),
            per_layer(params["wqkv"]),
            per_layer(params["wo"]),
            per_layer(params["norm2"]),
            per_layer(params["w12"]),
            per_layer(params["w3"]),
            full(params["final_norm"]),
            full(params["out_head"]),
        ],
        out_specs=pl.BlockSpec((M, V), lambda l: (0, 0)),
        scratch_shapes=[pltpu.VMEM((M, D), jnp.float32)],
        compiler_params=pltpu.CompilerParams(
            dimension_semantics=("arbitrary",)),
    )(x2d, cos, sin, mask_add,
      params["norm1"], params["wqkv"], params["wo"], params["norm2"],
      params["w12"], params["w3"], params["final_norm"], params["out_head"])

    return out.reshape(B, T, V)


# ----------------------------------------------------------------------------
# Deterministic parameter init (weights pre-fused / stacked for the kernel)
# ----------------------------------------------------------------------------
def init_params(cfg, key):
    D, V, HFF = cfg["emb_dim"], cfg["vocab_size"], cfg["hidden_dim"]
    H, G, L = cfg["n_heads"], cfg["n_kv_groups"], cfg["n_layers"]
    hd = D // H
    kvD = G * hd
    dt = cfg["dtype"]
    scale = 1.0 / math.sqrt(hd)

    def lin_f32(k, i, o):
        return 0.02 * jax.random.normal(k, (i, o), jnp.float32)

    def roll_heads(w, n_heads):
        # Rotate-half permutation folded into the projection columns:
        # W_rot[:, h*hd + j] = W[:, h*hd + (j - hd/2) mod hd]
        return jnp.concatenate(
            [jnp.roll(w[:, h * hd:(h + 1) * hd], hd // 2, axis=1)
             for h in range(n_heads)], axis=1)

    keys = jax.random.split(key, 2 + 7 * L)
    wqkv, wo, w12, w3 = [], [], [], []
    for l in range(L):
        k = keys[2 + 7 * l: 2 + 7 * (l + 1)]
        wq = lin_f32(k[0], D, D) * scale      # 1/sqrt(head_dim) folded into W_q
        wk = lin_f32(k[1], D, kvD)
        wv = lin_f32(k[2], D, kvD)
        # Fused [Q | Q_rot | K | K_rot | V] projection (D, 2D + 3*kvD) bf16.
        wqkv.append(jnp.concatenate(
            [wq, roll_heads(wq, H), wk, roll_heads(wk, G), wv],
            axis=1).astype(dt))
        wo.append(lin_f32(k[3], D, D).astype(dt))
        w12.append(jnp.concatenate(
            [lin_f32(k[4], D, HFF), lin_f32(k[5], D, HFF)], axis=1).astype(dt))
        w3.append(lin_f32(k[6], HFF, D).astype(dt))

    cos, sin = precompute_rope_params(hd, cfg["rope_base"],
                                      cfg["context_length"], cfg["rope_freq"])
    # Fold the rotate_half sign into sin: sign = -1 on the first half,
    # +1 on the second half of each head.
    sign = jnp.where(jnp.arange(hd) < hd // 2, -1.0, 1.0).astype(jnp.float32)

    return dict(
        tok_emb=(0.02 * jax.random.normal(keys[0], (V, D), jnp.float32)).astype(dt),
        out_head=lin_f32(keys[1], D, V).astype(dt),   # (D, V) bf16
        final_norm=jnp.ones((1, D), jnp.float32),
        norm1=jnp.ones((L, 1, D), jnp.float32),
        norm2=jnp.ones((L, 1, D), jnp.float32),
        wqkv=jnp.stack(wqkv),                         # (L, D, 2D+3kvD) bf16
        wo=jnp.stack(wo),                             # (L, D, D) bf16
        w12=jnp.stack(w12),                           # (L, D, 2*HFF) bf16
        w3=jnp.stack(w3),                             # (L, HFF, D) bf16
        rope_cos=cos,                                 # (ctx, hd) f32
        rope_sin_signed=sin * sign[None, :],          # (ctx, hd) f32, signed
    )


# ----------------------------------------------------------------------------
# Main
# ----------------------------------------------------------------------------
if __name__ == "__main__":
    key = jax.random.PRNGKey(0)
    pkey, ikey = jax.random.split(key)

    params = init_params(CFG, pkey)

    B, T = 2, 8
    in_idx = jax.random.randint(ikey, (B, T), 0, CFG["vocab_size"],
                                dtype=jnp.int32)

    logits = llama3_forward(params, in_idx, CFG)
    logits = jax.block_until_ready(logits)

    assert logits.shape == (B, T, CFG["vocab_size"]), logits.shape
    assert logits.dtype == CFG["dtype"], logits.dtype
    assert bool(jnp.all(jnp.isfinite(logits.astype(jnp.float32))))
    print("KERNEL_OK")
</pallas_src>

<mosaic_0001>
module attributes {stable_mosaic.version = 11 : i64} {
  func.func @kernel(%arg0: i32, %arg1: memref<16x64xbf16, #tpu.memory_space<vmem>>, %arg2: memref<16x64xf32, #tpu.memory_space<vmem>>, %arg3: memref<16x64xf32, #tpu.memory_space<vmem>>, %arg4: memref<16x8xf32, #tpu.memory_space<vmem>>, %arg5: memref<1x1x64xf32, #tpu.memory_space<vmem>>, %arg6: memref<1x64x224xbf16, #tpu.memory_space<vmem>>, %arg7: memref<1x64x64xbf16, #tpu.memory_space<vmem>>, %arg8: memref<1x1x64xf32, #tpu.memory_space<vmem>>, %arg9: memref<1x64x256xbf16, #tpu.memory_space<vmem>>, %arg10: memref<1x128x64xbf16, #tpu.memory_space<vmem>>, %arg11: memref<1x64xf32, #tpu.memory_space<vmem>>, %arg12: memref<64x128xbf16, #tpu.memory_space<vmem>>, %arg13: memref<16x128xbf16, #tpu.memory_space<vmem>>, %arg14: memref<16x64xf32, #tpu.memory_space<vmem>>) attributes {dimension_semantics = [#tpu.dimension_semantics<arbitrary>], iteration_bounds = array<i64: 2>, scalar_prefetch = 0 : i64, scratch_operands = 1 : i64, tpu.core_type = #tpu.core_type<tc>, window_params = [{pipeline_mode = #tpu.pipeline_mode<synchronous>, transform_indices = @transform_0, window_bounds = array<i64: 16, 64>}, {pipeline_mode = #tpu.pipeline_mode<synchronous>, transform_indices = @transform_1, window_bounds = array<i64: 16, 64>}, {pipeline_mode = #tpu.pipeline_mode<synchronous>, transform_indices = @transform_2, window_bounds = array<i64: 16, 64>}, {pipeline_mode = #tpu.pipeline_mode<synchronous>, transform_indices = @transform_3, window_bounds = array<i64: 16, 8>}, {transform_indices = @transform_4, window_bounds = array<i64: 1, 1, 64>}, {transform_indices = @transform_5, window_bounds = array<i64: 1, 64, 224>}, {transform_indices = @transform_6, window_bounds = array<i64: 1, 64, 64>}, {transform_indices = @transform_7, window_bounds = array<i64: 1, 1, 64>}, {transform_indices = @transform_8, window_bounds = array<i64: 1, 64, 256>}, {transform_indices = @transform_9, window_bounds = array<i64: 1, 128, 64>}, {pipeline_mode = #tpu.pipeline_mode<synchronous>, transform_indices = @transform_10, window_bounds = array<i64: 1, 64>}, {pipeline_mode = #tpu.pipeline_mode<synchronous>, transform_indices = @transform_11, window_bounds = array<i64: 64, 128>}, {pipeline_mode = #tpu.pipeline_mode<synchronous>, transform_indices = @transform_12, window_bounds = array<i64: 16, 128>}]} {
    %c0_i32 = arith.constant 0 : i32
    %0 = arith.cmpi eq, %arg0, %c0_i32 : i32
    %1 = arith.extui %0 : i1 to i32
    %c0_i32_0 = arith.constant 0 : i32
    %2 = arith.cmpi ne, %1, %c0_i32_0 : i32
    scf.if %2 {
      %c0_46 = arith.constant 0 : index
      %c0_47 = arith.constant 0 : index
      %155 = vector.load %arg1[%c0_46, %c0_47] : memref<16x64xbf16, #tpu.memory_space<vmem>>, vector<16x64xbf16>
      %156 = arith.extf %155 : vector<16x64xbf16> to vector<16x64xf32>
      %c0_48 = arith.constant 0 : index
      %c0_49 = arith.constant 0 : index
      %157 = vector.load %arg14[%c0_48, %c0_49] : memref<16x64xf32, #tpu.memory_space<vmem>>, vector<16x64xf32>
      tpu.vector_store %arg14[%c0_48, %c0_49], %156 {strides = array<i32>} : memref<16x64xf32, #tpu.memory_space<vmem>>, vector<16x64xf32>,
    } else {
    }
    %c0 = arith.constant 0 : index
    %c0_1 = arith.constant 0 : index
    %3 = vector.load %arg14[%c0, %c0_1] : memref<16x64xf32, #tpu.memory_space<vmem>>, vector<16x64xf32>
    %c0_2 = arith.constant 0 : index
    %c0_3 = arith.constant 0 : index
    %c0_4 = arith.constant 0 : index
    %4 = vector.load %arg5[%c0_2, %c0_3, %c0_4] : memref<1x1x64xf32, #tpu.memory_space<vmem>>, vector<1x1x64xf32>
    %5 = vector.shape_cast %4 : vector<1x1x64xf32> to vector<1x64xf32>
    %6 = arith.mulf %3, %3 : vector<16x64xf32>
    %cst = arith.constant dense<0.000000e+00> : vector<16xf32>
    %7 = vector.multi_reduction <add>, %6, %cst [1] : vector<16x64xf32> to vector<16xf32>
    %8 = vector.shape_cast %7 : vector<16xf32> to vector<16x1xf32>
    %cst_5 = arith.constant 6.400000e+01 : f32
    %9 = vector.broadcast %cst_5 : f32 to vector<16x1xf32>
    %10 = arith.divf %8, %9 : vector<16x1xf32>
    %cst_6 = arith.constant 9.99999974E-6 : f32
    %11 = vector.broadcast %cst_6 : f32 to vector<16x1xf32>
    %12 = arith.addf %10, %11 : vector<16x1xf32>
    %13 = math.rsqrt %12 : vector<16x1xf32>
    %14 = vector.broadcast %13 : vector<16x1xf32> to vector<16x64xf32>
    %15 = arith.mulf %3, %14 : vector<16x64xf32>
    %16 = vector.broadcast %5 : vector<1x64xf32> to vector<16x64xf32>
    %17 = arith.mulf %15, %16 : vector<16x64xf32>
    %18 = arith.truncf %17 : vector<16x64xf32> to vector<16x64xbf16>
    %c0_7 = arith.constant 0 : index
    %c0_8 = arith.constant 0 : index
    %c0_9 = arith.constant 0 : index
    %19 = vector.load %arg6[%c0_7, %c0_8, %c0_9] : memref<1x64x224xbf16, #tpu.memory_space<vmem>>, vector<1x64x224xbf16>
    %20 = vector.shape_cast %19 : vector<1x64x224xbf16> to vector<64x224xbf16>
    %cst_10 = arith.constant dense<0.000000e+00> : vector<16x224xf32>
    %21 = tpu.matmul %18, %20, %cst_10 {dimension_numbers = #tpu.dot_dimension_numbers<[1], [0], [0], [1], [0, 0, 1, 1], [], []>} : vector<16x64xbf16>, vector<64x224xbf16>, vector<16x224xf32> -> vector<16x224xf32>
    %c0_11 = arith.constant 0 : index
    %c0_12 = arith.constant 0 : index
    %22 = vector.load %arg2[%c0_11, %c0_12] : memref<16x64xf32, #tpu.memory_space<vmem>>, vector<16x64xf32>
    %c0_13 = arith.constant 0 : index
    %c0_14 = arith.constant 0 : index
    %23 = vector.load %arg3[%c0_13, %c0_14] : memref<16x64xf32, #tpu.memory_space<vmem>>, vector<16x64xf32>
    %24 = vector.extract_strided_slice %21 {offsets = [0, 0], sizes = [16, 64], strides = [1, 1]} : vector<16x224xf32> to vector<16x64xf32>
    %25 = arith.mulf %24, %22 : vector<16x64xf32>
    %26 = vector.extract_strided_slice %21 {offsets = [0, 64], sizes = [16, 64], strides = [1, 1]} : vector<16x224xf32> to vector<16x64xf32>
    %27 = arith.mulf %26, %23 : vector<16x64xf32>
    %28 = arith.addf %25, %27 : vector<16x64xf32>
    %29 = vector.extract_strided_slice %21 {offsets = [0, 128], sizes = [16, 32], strides = [1, 1]} : vector<16x224xf32> to vector<16x32xf32>
    %30 = vector.extract_strided_slice %22 {offsets = [0, 0], sizes = [16, 32], strides = [1, 1]} : vector<16x64xf32> to vector<16x32xf32>
    %31 = arith.mulf %29, %30 : vector<16x32xf32>
    %32 = vector.extract_strided_slice %21 {offsets = [0, 160], sizes = [16, 32], strides = [1, 1]} : vector<16x224xf32> to vector<16x32xf32>
    %33 = vector.extract_strided_slice %23 {offsets = [0, 0], sizes = [16, 32], strides = [1, 1]} : vector<16x64xf32> to vector<16x32xf32>
    %34 = arith.mulf %32, %33 : vector<16x32xf32>
    %35 = arith.addf %31, %34 : vector<16x32xf32>
    %36 = vector.extract_strided_slice %21 {offsets = [0, 192], sizes = [16, 32], strides = [1, 1]} : vector<16x224xf32> to vector<16x32xf32>
    %37 = arith.truncf %28 : vector<16x64xf32> to vector<16x64xbf16>
    %38 = arith.truncf %35 : vector<16x32xf32> to vector<16x32xbf16>
    %39 = arith.truncf %36 : vector<16x32xf32> to vector<16x32xbf16>
    %40 = vector.extract_strided_slice %37 {offsets = [0, 0], sizes = [16, 16], strides = [1, 1]} : vector<16x64xbf16> to vector<16x16xbf16>
    %41 = vector.shape_cast %40 : vector<16x16xbf16> to vector<2x8x16xbf16>
    %42 = vector.extract_strided_slice %37 {offsets = [0, 16], sizes = [16, 16], strides = [1, 1]} : vector<16x64xbf16> to vector<16x16xbf16>
    %43 = vector.shape_cast %42 : vector<16x16xbf16> to vector<2x8x16xbf16>
    %44 = tpu.concatenate %41, %43 in 1 : vector<2x8x16xbf16>, vector<2x8x16xbf16> -> vector<2x16x16xbf16>
    %45 = vector.extract_strided_slice %37 {offsets = [0, 32], sizes = [16, 16], strides = [1, 1]} : vector<16x64xbf16> to vector<16x16xbf16>
    %46 = vector.shape_cast %45 : vector<16x16xbf16> to vector<2x8x16xbf16>
    %47 = vector.extract_strided_slice %37 {offsets = [0, 48], sizes = [16, 16], strides = [1, 1]} : vector<16x64xbf16> to vector<16x16xbf16>
    %48 = vector.shape_cast %47 : vector<16x16xbf16> to vector<2x8x16xbf16>
    %49 = tpu.concatenate %46, %48 in 1 : vector<2x8x16xbf16>, vector<2x8x16xbf16> -> vector<2x16x16xbf16>
    %50 = vector.shape_cast %44 : vector<2x16x16xbf16> to vector<2x1x16x16xbf16>
    %51 = vector.shape_cast %49 : vector<2x16x16xbf16> to vector<2x1x16x16xbf16>
    %52 = tpu.concatenate %50, %51 in 1 : vector<2x1x16x16xbf16>, vector<2x1x16x16xbf16> -> vector<2x2x16x16xbf16>
    %53 = vector.shape_cast %52 : vector<2x2x16x16xbf16> to vector<4x16x16xbf16>
    %54 = vector.extract_strided_slice %38 {offsets = [0, 0], sizes = [16, 16], strides = [1, 1]} : vector<16x32xbf16> to vector<16x16xbf16>
    %55 = vector.shape_cast %54 : vector<16x16xbf16> to vector<2x8x16xbf16>
    %56 = vector.extract_strided_slice %38 {offsets = [0, 16], sizes = [16, 16], strides = [1, 1]} : vector<16x32xbf16> to vector<16x16xbf16>
    %57 = vector.shape_cast %56 : vector<16x16xbf16> to vector<2x8x16xbf16>
    %58 = vector.shape_cast %55 : vector<2x8x16xbf16> to vector<2x1x8x16xbf16>
    %59 = vector.shape_cast %57 : vector<2x8x16xbf16> to vector<2x1x8x16xbf16>
    %60 = tpu.concatenate %58, %59 in 1 : vector<2x1x8x16xbf16>, vector<2x1x8x16xbf16> -> vector<2x2x8x16xbf16>
    %61 = vector.shape_cast %60 : vector<2x2x8x16xbf16> to vector<4x8x16xbf16>
    %62 = vector.extract_strided_slice %39 {offsets = [0, 0], sizes = [16, 16], strides = [1, 1]} : vector<16x32xbf16> to vector<16x16xbf16>
    %63 = vector.shape_cast %62 : vector<16x16xbf16> to vector<2x8x16xbf16>
    %64 = vector.extract_strided_slice %39 {offsets = [0, 16], sizes = [16, 16], strides = [1, 1]} : vector<16x32xbf16> to vector<16x16xbf16>
    %65 = vector.shape_cast %64 : vector<16x16xbf16> to vector<2x8x16xbf16>
    %66 = vector.shape_cast %63 : vector<2x8x16xbf16> to vector<2x1x8x16xbf16>
    %67 = vector.shape_cast %65 : vector<2x8x16xbf16> to vector<2x1x8x16xbf16>
    %68 = tpu.concatenate %66, %67 in 1 : vector<2x1x8x16xbf16>, vector<2x1x8x16xbf16> -> vector<2x2x8x16xbf16>
    %69 = vector.shape_cast %68 : vector<2x2x8x16xbf16> to vector<4x8x16xbf16>
    "tpu.trace_start"() <{level = 10 : i32, message = "nqd,nkd->nqk"}> : () -> ()
    %cst_15 = arith.constant dense<0.000000e+00> : vector<4x16x8xf32>
    %70 = tpu.matmul %53, %61, %cst_15 {dimension_numbers = #tpu.dot_dimension_numbers<[2], [2], [1], [1], [0, 0, 0, 1, 1, 1], [0], [0]>} : vector<4x16x16xbf16>, vector<4x8x16xbf16>, vector<4x16x8xf32> -> vector<4x16x8xf32>
    "tpu.trace_stop"() : () -> ()
    %c0_16 = arith.constant 0 : index
    %c0_17 = arith.constant 0 : index
    %71 = vector.load %arg4[%c0_16, %c0_17] : memref<16x8xf32, #tpu.memory_space<vmem>>, vector<16x8xf32>
    %72 = vector.shape_cast %71 : vector<16x8xf32> to vector<1x16x8xf32>
    %73 = vector.broadcast %72 : vector<1x16x8xf32> to vector<4x16x8xf32>
    %74 = arith.addf %70, %73 : vector<4x16x8xf32>
    %cst_18 = arith.constant dense<0xFF800000> : vector<4x16xf32>
    %75 = vector.multi_reduction <maximumf>, %74, %cst_18 [2] : vector<4x16x8xf32> to vector<4x16xf32>
    %76 = vector.shape_cast %75 : vector<4x16xf32> to vector<4x16x1xf32>
    %77 = vector.broadcast %76 : vector<4x16x1xf32> to vector<4x16x8xf32>
    %78 = arith.subf %74, %77 : vector<4x16x8xf32>
    %79 = math.exp %78 : vector<4x16x8xf32>
    %cst_19 = arith.constant dense<0.000000e+00> : vector<4x16xf32>
    %80 = vector.multi_reduction <add>, %79, %cst_19 [2] : vector<4x16x8xf32> to vector<4x16xf32>
    %81 = vector.shape_cast %80 : vector<4x16xf32> to vector<4x16x1xf32>
    %82 = tpu.reciprocal %81 {approx = true} : vector<4x16x1xf32> -> vector<4x16x1xf32>
    %83 = vector.broadcast %82 : vector<4x16x1xf32> to vector<4x16x8xf32>
    %84 = arith.mulf %79, %83 : vector<4x16x8xf32>
    %85 = arith.truncf %84 : vector<4x16x8xf32> to vector<4x16x8xbf16>
    "tpu.trace_start"() <{level = 10 : i32, message = "nqk,nkd->nqd"}> : () -> ()
    %cst_20 = arith.constant dense<0.000000e+00> : vector<4x16x16xf32>
    %86 = tpu.matmul %85, %69, %cst_20 {dimension_numbers = #tpu.dot_dimension_numbers<[2], [1], [1], [2], [0, 0, 0, 1, 1, 2], [0], [0]>} : vector<4x16x8xbf16>, vector<4x8x16xbf16>, vector<4x16x16xf32> -> vector<4x16x16xf32>
    "tpu.trace_stop"() : () -> ()
    %87 = vector.shape_cast %86 : vector<4x16x16xf32> to vector<2x2x2x8x16xf32>
    %c0_21 = arith.constant 0 : index
    %c0_22 = arith.constant 0 : index
    %c0_23 = arith.constant 0 : index
    %88 = vector.load %arg7[%c0_21, %c0_22, %c0_23] : memref<1x64x64xbf16, #tpu.memory_space<vmem>>, vector<1x64x64xbf16>
    %89 = vector.shape_cast %88 : vector<1x64x64xbf16> to vector<64x64xbf16>
    %90 = vector.extract_strided_slice %87 {offsets = [0, 0, 0, 0, 0], sizes = [2, 1, 1, 8, 16], strides = [1, 1, 1, 1, 1]} : vector<2x2x2x8x16xf32> to vector<2x1x1x8x16xf32>
    %91 = vector.shape_cast %90 : vector<2x1x1x8x16xf32> to vector<2x8x16xf32>
    %92 = vector.shape_cast %91 : vector<2x8x16xf32> to vector<16x16xf32>
    %93 = arith.truncf %92 : vector<16x16xf32> to vector<16x16xbf16>
    %94 = vector.extract_strided_slice %89 {offsets = [0, 0], sizes = [16, 64], strides = [1, 1]} : vector<64x64xbf16> to vector<16x64xbf16>
    %cst_24 = arith.constant dense<0.000000e+00> : vector<16x64xf32>
    %95 = tpu.matmul %93, %94, %cst_24 {dimension_numbers = #tpu.dot_dimension_numbers<[1], [0], [0], [1], [0, 0, 1, 1], [], []>} : vector<16x16xbf16>, vector<16x64xbf16>, vector<16x64xf32> -> vector<16x64xf32>
    %96 = vector.extract_strided_slice %87 {offsets = [0, 0, 1, 0, 0], sizes = [2, 1, 1, 8, 16], strides = [1, 1, 1, 1, 1]} : vector<2x2x2x8x16xf32> to vector<2x1x1x8x16xf32>
    %97 = vector.shape_cast %96 : vector<2x1x1x8x16xf32> to vector<2x8x16xf32>
    %98 = vector.shape_cast %97 : vector<2x8x16xf32> to vector<16x16xf32>
    %99 = arith.truncf %98 : vector<16x16xf32> to vector<16x16xbf16>
    %100 = vector.extract_strided_slice %89 {offsets = [16, 0], sizes = [16, 64], strides = [1, 1]} : vector<64x64xbf16> to vector<16x64xbf16>
    %cst_25 = arith.constant dense<0.000000e+00> : vector<16x64xf32>
    %101 = tpu.matmul %99, %100, %cst_25 {dimension_numbers = #tpu.dot_dimension_numbers<[1], [0], [0], [1], [0, 0, 1, 1], [], []>} : vector<16x16xbf16>, vector<16x64xbf16>, vector<16x64xf32> -> vector<16x64xf32>
    %102 = arith.addf %95, %101 : vector<16x64xf32>
    %103 = vector.extract_strided_slice %87 {offsets = [0, 1, 0, 0, 0], sizes = [2, 1, 1, 8, 16], strides = [1, 1, 1, 1, 1]} : vector<2x2x2x8x16xf32> to vector<2x1x1x8x16xf32>
    %104 = vector.shape_cast %103 : vector<2x1x1x8x16xf32> to vector<2x8x16xf32>
    %105 = vector.shape_cast %104 : vector<2x8x16xf32> to vector<16x16xf32>
    %106 = arith.truncf %105 : vector<16x16xf32> to vector<16x16xbf16>
    %107 = vector.extract_strided_slice %89 {offsets = [32, 0], sizes = [16, 64], strides = [1, 1]} : vector<64x64xbf16> to vector<16x64xbf16>
    %cst_26 = arith.constant dense<0.000000e+00> : vector<16x64xf32>
    %108 = tpu.matmul %106, %107, %cst_26 {dimension_numbers = #tpu.dot_dimension_numbers<[1], [0], [0], [1], [0, 0, 1, 1], [], []>} : vector<16x16xbf16>, vector<16x64xbf16>, vector<16x64xf32> -> vector<16x64xf32>
    %109 = arith.addf %102, %108 : vector<16x64xf32>
    %110 = vector.extract_strided_slice %87 {offsets = [0, 1, 1, 0, 0], sizes = [2, 1, 1, 8, 16], strides = [1, 1, 1, 1, 1]} : vector<2x2x2x8x16xf32> to vector<2x1x1x8x16xf32>
    %111 = vector.shape_cast %110 : vector<2x1x1x8x16xf32> to vector<2x8x16xf32>
    %112 = vector.shape_cast %111 : vector<2x8x16xf32> to vector<16x16xf32>
    %113 = arith.truncf %112 : vector<16x16xf32> to vector<16x16xbf16>
    %114 = vector.extract_strided_slice %89 {offsets = [48, 0], sizes = [16, 64], strides = [1, 1]} : vector<64x64xbf16> to vector<16x64xbf16>
    %cst_27 = arith.constant dense<0.000000e+00> : vector<16x64xf32>
    %115 = tpu.matmul %113, %114, %cst_27 {dimension_numbers = #tpu.dot_dimension_numbers<[1], [0], [0], [1], [0, 0, 1, 1], [], []>} : vector<16x16xbf16>, vector<16x64xbf16>, vector<16x64xf32> -> vector<16x64xf32>
    %116 = arith.addf %109, %115 : vector<16x64xf32>
    %117 = arith.addf %3, %116 : vector<16x64xf32>
    %c0_28 = arith.constant 0 : index
    %c0_29 = arith.constant 0 : index
    %c0_30 = arith.constant 0 : index
    %118 = vector.load %arg8[%c0_28, %c0_29, %c0_30] : memref<1x1x64xf32, #tpu.memory_space<vmem>>, vector<1x1x64xf32>
    %119 = vector.shape_cast %118 : vector<1x1x64xf32> to vector<1x64xf32>
    %120 = arith.mulf %117, %117 : vector<16x64xf32>
    %cst_31 = arith.constant dense<0.000000e+00> : vector<16xf32>
    %121 = vector.multi_reduction <add>, %120, %cst_31 [1] : vector<16x64xf32> to vector<16xf32>
    %122 = vector.shape_cast %121 : vector<16xf32> to vector<16x1xf32>
    %cst_32 = arith.constant 6.400000e+01 : f32
    %123 = vector.broadcast %cst_32 : f32 to vector<16x1xf32>
    %124 = arith.divf %122, %123 : vector<16x1xf32>
    %cst_33 = arith.constant 9.99999974E-6 : f32
    %125 = vector.broadcast %cst_33 : f32 to vector<16x1xf32>
    %126 = arith.addf %124, %125 : vector<16x1xf32>
    %127 = math.rsqrt %126 : vector<16x1xf32>
    %128 = vector.broadcast %127 : vector<16x1xf32> to vector<16x64xf32>
    %129 = arith.mulf %117, %128 : vector<16x64xf32>
    %130 = vector.broadcast %119 : vector<1x64xf32> to vector<16x64xf32>
    %131 = arith.mulf %129, %130 : vector<16x64xf32>
    %132 = arith.truncf %131 : vector<16x64xf32> to vector<16x64xbf16>
    %c0_34 = arith.constant 0 : index
    %c0_35 = arith.constant 0 : index
    %c0_36 = arith.constant 0 : index
    %133 = vector.load %arg9[%c0_34, %c0_35, %c0_36] : memref<1x64x256xbf16, #tpu.memory_space<vmem>>, vector<1x64x256xbf16>
    %134 = vector.shape_cast %133 : vector<1x64x256xbf16> to vector<64x256xbf16>
    %cst_37 = arith.constant dense<0.000000e+00> : vector<16x256xf32>
    %135 = tpu.matmul %132, %134, %cst_37 {dimension_numbers = #tpu.dot_dimension_numbers<[1], [0], [0], [1], [0, 0, 1, 1], [], []>} : vector<16x64xbf16>, vector<64x256xbf16>, vector<16x256xf32> -> vector<16x256xf32>
    %136 = vector.extract_strided_slice %135 {offsets = [0, 0], sizes = [16, 128], strides = [1, 1]} : vector<16x256xf32> to vector<16x128xf32>
    %137 = arith.truncf %136 : vector<16x128xf32> to vector<16x128xbf16>
    %138 = vector.extract_strided_slice %135 {offsets = [0, 128], sizes = [16, 128], strides = [1, 1]} : vector<16x256xf32> to vector<16x128xf32>
    %139 = arith.truncf %138 : vector<16x128xf32> to vector<16x128xbf16>
    %140 = arith.negf %137 : vector<16x128xbf16>
    %141 = math.exp %140 : vector<16x128xbf16>
    %cst_38 = arith.constant 1.000000e+00 : bf16
    %142 = vector.broadcast %cst_38 : bf16 to vector<16x128xbf16>
    %143 = arith.addf %142, %141 : vector<16x128xbf16>
    %144 = arith.divf %142, %143 : vector<16x128xbf16>
    %145 = arith.mulf %137, %144 : vector<16x128xbf16>
    %146 = arith.mulf %145, %139 : vector<16x128xbf16>
    %c0_39 = arith.constant 0 : index
    %c0_40 = arith.constant 0 : index
    %c0_41 = arith.constant 0 : index
    %147 = vector.load %arg10[%c0_39, %c0_40, %c0_41] : memref<1x128x64xbf16, #tpu.memory_space<vmem>>, vector<1x128x64xbf16>
    %148 = vector.shape_cast %147 : vector<1x128x64xbf16> to vector<128x64xbf16>
    %cst_42 = arith.constant dense<0.000000e+00> : vector<16x64xf32>
    %149 = tpu.matmul %146, %148, %cst_42 {dimension_numbers = #tpu.dot_dimension_numbers<[1], [0], [0], [1], [0, 0, 1, 1], [], []>} : vector<16x128xbf16>, vector<128x64xbf16>, vector<16x64xf32> -> vector<16x64xf32>
    %150 = arith.addf %117, %149 : vector<16x64xf32>
    %c0_43 = arith.constant 0 : index
    %c0_44 = arith.constant 0 : index
    %151 = vector.load %arg14[%c0_43, %c0_44] : memref<16x64xf32, #tpu.memory_space<vmem>>, vector<16x64xf32>
    tpu.vector_store %arg14[%c0_43, %c0_44], %150 {strides = array<i32>} : memref<16x64xf32, #tpu.memory_space<vmem>>, vector<16x64xf32>,
    %c1_i32 = arith.constant 1 : i32
    %152 = arith.cmpi eq, %arg0, %c1_i32 : i32
    %153 = arith.extui %152 : i1 to i32
    %c0_i32_45 = arith.constant 0 : i32
    %154 = arith.cmpi ne, %153, %c0_i32_45 : i32
    scf.if %154 {
      %c0_46 = arith.constant 0 : index
      %c0_47 = arith.constant 0 : index
      %155 = vector.load %arg11[%c0_46, %c0_47] : memref<1x64xf32, #tpu.memory_space<vmem>>, vector<1x64xf32>
      %156 = arith.mulf %150, %150 : vector<16x64xf32>
      %cst_48 = arith.constant dense<0.000000e+00> : vector<16xf32>
      %157 = vector.multi_reduction <add>, %156, %cst_48 [1] : vector<16x64xf32> to vector<16xf32>
      %158 = vector.shape_cast %157 : vector<16xf32> to vector<16x1xf32>
      %cst_49 = arith.constant 6.400000e+01 : f32
      %159 = vector.broadcast %cst_49 : f32 to vector<16x1xf32>
      %160 = arith.divf %158, %159 : vector<16x1xf32>
      %cst_50 = arith.constant 9.99999974E-6 : f32
      %161 = vector.broadcast %cst_50 : f32 to vector<16x1xf32>
      %162 = arith.addf %160, %161 : vector<16x1xf32>
      %163 = math.rsqrt %162 : vector<16x1xf32>
      %164 = vector.broadcast %163 : vector<16x1xf32> to vector<16x64xf32>
      %165 = arith.mulf %150, %164 : vector<16x64xf32>
      %166 = vector.broadcast %155 : vector<1x64xf32> to vector<16x64xf32>
      %167 = arith.mulf %165, %166 : vector<16x64xf32>
      %168 = arith.truncf %167 : vector<16x64xf32> to vector<16x64xbf16>
      %c0_51 = arith.constant 0 : index
      %c0_52 = arith.constant 0 : index
      %169 = vector.load %arg12[%c0_51, %c0_52] : memref<64x128xbf16, #tpu.memory_space<vmem>>, vector<64x128xbf16>
      %cst_53 = arith.constant dense<0.000000e+00> : vector<16x128xf32>
      %170 = tpu.matmul %168, %169, %cst_53 {dimension_numbers = #tpu.dot_dimension_numbers<[1], [0], [0], [1], [0, 0, 1, 1], [], []>} : vector<16x64xbf16>, vector<64x128xbf16>, vector<16x128xf32> -> vector<16x128xf32>
      %171 = arith.truncf %170 : vector<16x128xf32> to vector<16x128xbf16>
      %c0_54 = arith.constant 0 : index
      %c0_55 = arith.constant 0 : index
      %172 = vector.load %arg13[%c0_54, %c0_55] : memref<16x128xbf16, #tpu.memory_space<vmem>>, vector<16x128xbf16>
      tpu.vector_store %arg13[%c0_54, %c0_55], %171 {strides = array<i32>} : memref<16x128xbf16, #tpu.memory_space<vmem>>, vector<16x128xbf16>,
    } else {
    }
    return
  }
  func.func @transform_0(%arg0: i32) -> (i32, i32) {
    %c0_i32 = arith.constant 0 : i32
    %c0_i32_0 = arith.constant 0 : i32
    %c0_i32_1 = arith.constant 0 : i32
    return %c0_i32, %c0_i32_0 : i32, i32
  }
  func.func @transform_1(%arg0: i32) -> (i32, i32) {
    %c0_i32 = arith.constant 0 : i32
    %c0_i32_0 = arith.constant 0 : i32
    %c0_i32_1 = arith.constant 0 : i32
    return %c0_i32, %c0_i32_0 : i32, i32
  }
  func.func @transform_2(%arg0: i32) -> (i32, i32) {
    %c0_i32 = arith.constant 0 : i32
    %c0_i32_0 = arith.constant 0 : i32
    %c0_i32_1 = arith.constant 0 : i32
    return %c0_i32, %c0_i32_0 : i32, i32
  }
  func.func @transform_3(%arg0: i32) -> (i32, i32) {
    %c0_i32 = arith.constant 0 : i32
    %c0_i32_0 = arith.constant 0 : i32
    %c0_i32_1 = arith.constant 0 : i32
    return %c0_i32, %c0_i32_0 : i32, i32
  }
  func.func @transform_4(%arg0: i32) -> (i32, i32, i32) {
    %c0_i32 = arith.constant 0 : i32
    %c0_i32_0 = arith.constant 0 : i32
    %c0_i32_1 = arith.constant 0 : i32
    return %arg0, %c0_i32, %c0_i32_0 : i32, i32, i32
  }
  func.func @transform_5(%arg0: i32) -> (i32, i32, i32) {
    %c0_i32 = arith.constant 0 : i32
    %c0_i32_0 = arith.constant 0 : i32
    %c0_i32_1 = arith.constant 0 : i32
    return %arg0, %c0_i32, %c0_i32_0 : i32, i32, i32
  }
  func.func @transform_6(%arg0: i32) -> (i32, i32, i32) {
    %c0_i32 = arith.constant 0 : i32
    %c0_i32_0 = arith.constant 0 : i32
    %c0_i32_1 = arith.constant 0 : i32
    return %arg0, %c0_i32, %c0_i32_0 : i32, i32, i32
  }
  func.func @transform_7(%arg0: i32) -> (i32, i32, i32) {
    %c0_i32 = arith.constant 0 : i32
    %c0_i32_0 = arith.constant 0 : i32
    %c0_i32_1 = arith.constant 0 : i32
    return %arg0, %c0_i32, %c0_i32_0 : i32, i32, i32
  }
  func.func @transform_8(%arg0: i32) -> (i32, i32, i32) {
    %c0_i32 = arith.constant 0 : i32
    %c0_i32_0 = arith.constant 0 : i32
    %c0_i32_1 = arith.constant 0 : i32
    return %arg0, %c0_i32, %c0_i32_0 : i32, i32, i32
  }
  func.func @transform_9(%arg0: i32) -> (i32, i32, i32) {
    %c0_i32 = arith.constant 0 : i32
    %c0_i32_0 = arith.constant 0 : i32
    %c0_i32_1 = arith.constant 0 : i32
    return %arg0, %c0_i32, %c0_i32_0 : i32, i32, i32
  }
  func.func @transform_10(%arg0: i32) -> (i32, i32) {
    %c0_i32 = arith.constant 0 : i32
    %c0_i32_0 = arith.constant 0 : i32
    %c0_i32_1 = arith.constant 0 : i32
    return %c0_i32, %c0_i32_0 : i32, i32
  }
  func.func @transform_11(%arg0: i32) -> (i32, i32) {
    %c0_i32 = arith.constant 0 : i32
    %c0_i32_0 = arith.constant 0 : i32
    %c0_i32_1 = arith.constant 0 : i32
    return %c0_i32, %c0_i32_0 : i32, i32
  }
  func.func @transform_12(%arg0: i32) -> (i32, i32) {
    %c0_i32 = arith.constant 0 : i32
    %c0_i32_0 = arith.constant 0 : i32
    %c0_i32_1 = arith.constant 0 : i32
    return %c0_i32, %c0_i32_0 : i32, i32
  }
}

</mosaic_0001>

<llo_original>
// kernel: tpu_custom_call.1
$region0: #{tpu_custom_call.1}
  #allocation0 [shape = 'u32[]', space=smem, size = 0x4, offset = 0x4, fixed_abs, tag = 'smem constant byte address 0x4 - core index']
  #allocation1 [shape = 'u32[144,128]{1,0:T(1,128)}', space=vmem, size = 0x12000, scoped, tag = 'internal scratch']
  #allocation2 [shape = 'f32[16,64]{1,0:T(8,128)}', space=vmem, size = 0x2000, scoped, tag = 'scratch operand']
  %s0 = inlined_call_operand.vmem [shape: bf16[16,64], index: 0, kind: input, shape index: {}]
  %s1 = inlined_call_operand.hbm [shape: f32[16,64], index: 1, kind: input, shape index: {}]
  %s2 = inlined_call_operand.hbm [shape: f32[16,64], index: 2, kind: input, shape index: {}]
  %s3 = inlined_call_operand.vmem [shape: f32[16,8], index: 3, kind: input, shape index: {}]
  %s4 = inlined_call_operand.vmem [shape: f32[2,1,64], index: 4, kind: input, shape index: {}]
  %s5 = inlined_call_operand.vmem [shape: bf16[2,64,224], index: 5, kind: input, shape index: {}]
  %s6 = inlined_call_operand.vmem [shape: bf16[2,64,64], index: 6, kind: input, shape index: {}]
  %s7 = inlined_call_operand.vmem [shape: f32[2,1,64], index: 7, kind: input, shape index: {}]
  %s8 = inlined_call_operand.hbm [shape: bf16[2,64,256], index: 8, kind: input, shape index: {}]
  %s9 = inlined_call_operand.vmem [shape: bf16[2,128,64], index: 9, kind: input, shape index: {}]
  %s10 = inlined_call_operand.vmem [shape: f32[1,64], index: 10, kind: input, shape index: {}]
  %s11 = inlined_call_operand.vmem [shape: bf16[64,128], index: 11, kind: input, shape index: {}]
  %s12 = inlined_call_operand.hbm [shape: bf16[16,128], index: 12, kind: output, shape index: {}]
  %s13 = sld [smem:[#allocation0]]
  $region101: #{tpu_custom_call.1} parent=0
    _
  %s15 = ssub.s32 1, %s13
  %s16 = scalar_select 0, %s15, %s13
  $region1: #{tpu_custom_call.1} parent=0
    #allocation3 [shape = 'u8[8192]{0}', space=vmem, size = 0x2000, scoped, tag = 'input window, operand 1, single buffered']
    #allocation4 [shape = 's32[2]{0}', space=sflag, size = 0x8, scoped, tag = 'scoped memory for tpu_custom_call.1']
    #allocation5 [shape = 's32[2]{0}', space=sflag, size = 0x8, scoped, tag = 'scoped memory for tpu_custom_call.1']
    #allocation6 [shape = 'u8[8192]{0}', space=vmem, size = 0x2000, scoped, tag = 'input window, operand 2, single buffered']
    #allocation7 [shape = 's32[1]{0}', space=sflag, size = 0x4, scoped, tag = 'scoped memory for tpu_custom_call.1']
    #allocation8 [shape = 'u8[65536]{0}', space=vmem, size = 0x10000, scoped, tag = 'input window, operand 8']
    #allocation9 [shape = 'u8[4096]{0}', space=vmem, size = 0x1000, scoped, tag = 'output window, operand 0, single buffered']
    %17 = vsyncpa [#allocation4], 0
    %18 = vsyncpa [#allocation7], 0
    %19 = vsyncpa [#allocation5], 0
    loop: start=0, step=1, limit=4
    $region2: #{tpu_custom_call.1} parent=1 // loop_pre_header
      _
    $region3: #{tpu_custom_call.1} parent=1 // loop_header
      %s21 = sphi 0, %s25
      %p22 = scmp.ge.s32.totalorder %s21, 4
      %s29 = sphi 0, %s29
      %s31 = sphi 0, %s29
      %s32 = sphi 0, %s31
      %s46 = sphi 0, %s32
      %s50 = sphi 0, %s50
      %s52 = sphi 0, %s50
      %s53 = sphi 0, %s52
      %s67 = sphi 0, %s53
      %s71 = sphi 0, %s71
      %s73 = sphi 0, %s71
      %s74 = sphi 0, %s73
      %s88 = sphi 0, %s74
      %s92 = sphi 0, %s92
      %s94 = sphi 0, %s92
      %s95 = sphi 0, %s94
      %s109 = sphi 0, %s95
      %s115 = sphi 0, %s117
      %s118 = sphi 0, %s115
      %s119 = sphi 0, %s118
      %s135 = sphi 0, %s119
      %s141 = sphi 0, %s143
      %s144 = sphi 0, %s141
      %s145 = sphi 0, %s144
      %s161 = sphi 0, %s145
      %s167 = sphi 0, %s169
      %s170 = sphi 0, %s167
      %s171 = sphi 0, %s170
      %s187 = sphi 0, %s171
      %s193 = sphi 0, %s195
      %s196 = sphi 0, %s193
      %s197 = sphi 0, %s196
      %s213 = sphi 0, %s197
      %s219 = sphi 0, %s221
      %s222 = sphi 0, %s219
      %s223 = sphi 0, %s222
      %s239 = sphi 0, %s223
      %s245 = sphi 0, %s247
      %s248 = sphi 0, %s245
      %s249 = sphi 0, %s248
      %s265 = sphi 0, %s249
      %s269 = sphi 0, %s269
      %s271 = sphi 0, %s269
      %s272 = sphi 0, %s271
      %s286 = sphi 0, %s272
      %s290 = sphi 0, %s290
      %s292 = sphi 0, %s290
      %s293 = sphi 0, %s292
      %s307 = sphi 0, %s293
      %s311 = sphi 0, %s311
      %s313 = sphi 0, %s311
      %s314 = sphi 0, %s313
      %s328 = sphi 0, %s314
    $region4: #{tpu_custom_call.1} parent=1 // loop_header_branch
      %24 = sbr.rel (%p22) target = $region8
    $region5: #{tpu_custom_call.1} parent=1 // loop_body
      %s26 = ssub.s32 %s21, 1
      %s27 = ssub.s32 %s21, 2
      %s28 = sadd.s32 %s21, 1
      %s30 = sadd.s32 %s29, 1
      %p33 = scmp.eq.s32.totalorder %s21, 1
      %p34 = scmp.ne.s32.totalorder %s29, %s31
      %p35 = scmp.eq.s32.totalorder %s21, 0
      %p36 = por %p34, %p35
      %p37 = scmp.ne.s32.totalorder %s29, %s31
      %p38 = scmp.eq.s32.totalorder %s26, 1
      %p39 = por %p37, %p38
      %p40 = scmp.ne.s32.totalorder %s31, %s32
      %p41 = scmp.eq.s32.totalorder %s26, 0
      %p42 = por %p40, %p41
      %p43 = scmp.ne.s32.totalorder %s31, %s32
      %p44 = scmp.eq.s32.totalorder %s27, 1
      %p45 = por %p43, %p44
      %p47 = scmp.ne.s32.totalorder %s32, %s46
      %p48 = scmp.eq.s32.totalorder %s27, 0
      %p49 = por %p47, %p48
      %s51 = sadd.s32 %s50, 1
      %p54 = scmp.eq.s32.totalorder %s21, 1
      %p55 = scmp.ne.s32.totalorder %s50, %s52
      %p56 = scmp.eq.s32.totalorder %s21, 0
      %p57 = por %p55, %p56
      %p58 = scmp.ne.s32.totalorder %s50, %s52
      %p59 = scmp.eq.s32.totalorder %s26, 1
      %p60 = por %p58, %p59
      %p61 = scmp.ne.s32.totalorder %s52, %s53
      %p62 = scmp.eq.s32.totalorder %s26, 0
      %p63 = por %p61, %p62
      %p64 = scmp.ne.s32.totalorder %s52, %s53
      %p65 = scmp.eq.s32.totalorder %s27, 1
      %p66 = por %p64, %p65
      %p68 = scmp.ne.s32.totalorder %s53, %s67
      %p69 = scmp.eq.s32.totalorder %s27, 0
      %p70 = por %p68, %p69
      %s72 = sadd.s32 %s71, 1
      %p75 = scmp.eq.s32.totalorder %s21, 1
      %p76 = scmp.ne.s32.totalorder %s71, %s73
      %p77 = scmp.eq.s32.totalorder %s21, 0
      %p78 = por %p76, %p77
      %p79 = scmp.ne.s32.totalorder %s71, %s73
      %p80 = scmp.eq.s32.totalorder %s26, 1
      %p81 = por %p79, %p80
      %p82 = scmp.ne.s32.totalorder %s73, %s74
      %p83 = scmp.eq.s32.totalorder %s26, 0
      %p84 = por %p82, %p83
      %p85 = scmp.ne.s32.totalorder %s73, %s74
      %p86 = scmp.eq.s32.totalorder %s27, 1
      %p87 = por %p85, %p86
      %p89 = scmp.ne.s32.totalorder %s74, %s88
      %p90 = scmp.eq.s32.totalorder %s27, 0
      %p91 = por %p89, %p90
      %s93 = sadd.s32 %s92, 1
      %p96 = scmp.eq.s32.totalorder %s21, 1
      %p97 = scmp.ne.s32.totalorder %s92, %s94
      %p98 = scmp.eq.s32.totalorder %s21, 0
      %p99 = por %p97, %p98
      %p100 = scmp.ne.s32.totalorder %s92, %s94
      %p101 = scmp.eq.s32.totalorder %s26, 1
      %p102 = por %p100, %p101
      %p103 = scmp.ne.s32.totalorder %s94, %s95
      %p104 = scmp.eq.s32.totalorder %s26, 0
      %p105 = por %p103, %p104
      %p106 = scmp.ne.s32.totalorder %s94, %s95
      %p107 = scmp.eq.s32.totalorder %s27, 1
      %p108 = por %p106, %p107
      %p110 = scmp.ne.s32.totalorder %s95, %s109
      %p111 = scmp.eq.s32.totalorder %s27, 0
      %p112 = por %p110, %p111
      %s113 = ssub.s32 %s21, %s28
      %p114 = scmp.eq.s32.totalorder %s113, 0
      %s116 = sadd.s32 %s115, 1
      %s117 = scalar_select %p114, %s115, %s116
      %p120 = pneg %p114
      %p121 = scmp.eq.s32.totalorder %s21, 1
      %p122 = por %p120, %p121
      %p123 = scmp.ne.s32.totalorder %s115, %s118
      %p124 = scmp.eq.s32.totalorder %s21, 0
      %p125 = por %p123, %p124
      %p126 = scmp.ne.s32.totalorder %s115, %s118
      %p127 = scmp.eq.s32.totalorder %s26, 1
      %p128 = por %p126, %p127
      %p129 = scmp.ne.s32.totalorder %s118, %s119
      %p130 = scmp.eq.s32.totalorder %s26, 0
      %p131 = por %p129, %p130
      %p132 = scmp.ne.s32.totalorder %s118, %s119
      %p133 = scmp.eq.s32.totalorder %s27, 1
      %p134 = por %p132, %p133
      %p136 = scmp.ne.s32.totalorder %s119, %s135
      %p137 = scmp.eq.s32.totalorder %s27, 0
      %p138 = por %p136, %p137
      %s139 = ssub.s32 %s21, %s28
      %p140 = scmp.eq.s32.totalorder %s139, 0
      %s142 = sadd.s32 %s141, 1
      %s143 = scalar_select %p140, %s141, %s142
      %p146 = pneg %p140
      %p147 = scmp.eq.s32.totalorder %s21, 1
      %p148 = por %p146, %p147
      %p149 = scmp.ne.s32.totalorder %s141, %s144
      %p150 = scmp.eq.s32.totalorder %s21, 0
      %p151 = por %p149, %p150
      %p152 = scmp.ne.s32.totalorder %s141, %s144
      %p153 = scmp.eq.s32.totalorder %s26, 1
      %p154 = por %p152, %p153
      %p155 = scmp.ne.s32.totalorder %s144, %s145
      %p156 = scmp.eq.s32.totalorder %s26, 0
      %p157 = por %p155, %p156
      %p158 = scmp.ne.s32.totalorder %s144, %s145
      %p159 = scmp.eq.s32.totalorder %s27, 1
      %p160 = por %p158, %p159
      %p162 = scmp.ne.s32.totalorder %s145, %s161
      %p163 = scmp.eq.s32.totalorder %s27, 0
      %p164 = por %p162, %p163
      %s165 = ssub.s32 %s21, %s28
      %p166 = scmp.eq.s32.totalorder %s165, 0
      %s168 = sadd.s32 %s167, 1
      %s169 = scalar_select %p166, %s167, %s168
      %p172 = pneg %p166
      %p173 = scmp.eq.s32.totalorder %s21, 1
      %p174 = por %p172, %p173
      %p175 = scmp.ne.s32.totalorder %s167, %s170
      %p176 = scmp.eq.s32.totalorder %s21, 0
      %p177 = por %p175, %p176
      %p178 = scmp.ne.s32.totalorder %s167, %s170
      %p179 = scmp.eq.s32.totalorder %s26, 1
      %p180 = por %p178, %p179
      %p181 = scmp.ne.s32.totalorder %s170, %s171
      %p182 = scmp.eq.s32.totalorder %s26, 0
      %p183 = por %p181, %p182
      %p184 = scmp.ne.s32.totalorder %s170, %s171
      %p185 = scmp.eq.s32.totalorder %s27, 1
      %p186 = por %p184, %p185
      %p188 = scmp.ne.s32.totalorder %s171, %s187
      %p189 = scmp.eq.s32.totalorder %s27, 0
      %p190 = por %p188, %p189
      %s191 = ssub.s32 %s21, %s28
      %p192 = scmp.eq.s32.totalorder %s191, 0
      %s194 = sadd.s32 %s193, 1
      %s195 = scalar_select %p192, %s193, %s194
      %p198 = pneg %p192
      %p199 = scmp.eq.s32.totalorder %s21, 1
      %p200 = por %p198, %p199
      %p201 = scmp.ne.s32.totalorder %s193, %s196
      %p202 = scmp.eq.s32.totalorder %s21, 0
      %p203 = por %p201, %p202
      %p204 = scmp.ne.s32.totalorder %s193, %s196
      %p205 = scmp.eq.s32.totalorder %s26, 1
      %p206 = por %p204, %p205
      %p207 = scmp.ne.s32.totalorder %s196, %s197
      %p208 = scmp.eq.s32.totalorder %s26, 0
      %p209 = por %p207, %p208
      %p210 = scmp.ne.s32.totalorder %s196, %s197
      %p211 = scmp.eq.s32.totalorder %s27, 1
      %p212 = por %p210, %p211
      %p214 = scmp.ne.s32.totalorder %s197, %s213
      %p215 = scmp.eq.s32.totalorder %s27, 0
      %p216 = por %p214, %p215
      %s217 = ssub.s32 %s21, %s28
      %p218 = scmp.eq.s32.totalorder %s217, 0
      %s220 = sadd.s32 %s219, 1
      %s221 = scalar_select %p218, %s219, %s220
      %p224 = pneg %p218
      %p225 = scmp.eq.s32.totalorder %s21, 1
      %p226 = por %p224, %p225
      %p227 = scmp.ne.s32.totalorder %s219, %s222
      %p228 = scmp.eq.s32.totalorder %s21, 0
      %p229 = por %p227, %p228
      %p230 = scmp.ne.s32.totalorder %s219, %s222
      %p231 = scmp.eq.s32.totalorder %s26, 1
      %p232 = por %p230, %p231
      %p233 = scmp.ne.s32.totalorder %s222, %s223
      %p234 = scmp.eq.s32.totalorder %s26, 0
      %p235 = por %p233, %p234
      %p236 = scmp.ne.s32.totalorder %s222, %s223
      %p237 = scmp.eq.s32.totalorder %s27, 1
      %p238 = por %p236, %p237
      %p240 = scmp.ne.s32.totalorder %s223, %s239
      %p241 = scmp.eq.s32.totalorder %s27, 0
      %p242 = por %p240, %p241
      %s243 = ssub.s32 %s21, %s28
      %p244 = scmp.eq.s32.totalorder %s243, 0
      %s246 = sadd.s32 %s245, 1
      %s247 = scalar_select %p244, %s245, %s246
      %p250 = pneg %p244
      %p251 = scmp.eq.s32.totalorder %s21, 1
      %p252 = por %p250, %p251
      %p253 = scmp.ne.s32.totalorder %s245, %s248
      %p254 = scmp.eq.s32.totalorder %s21, 0
      %p255 = por %p253, %p254
      %p256 = scmp.ne.s32.totalorder %s245, %s248
      %p257 = scmp.eq.s32.totalorder %s26, 1
      %p258 = por %p256, %p257
      %p259 = scmp.ne.s32.totalorder %s248, %s249
      %p260 = scmp.eq.s32.totalorder %s26, 0
      %p261 = por %p259, %p260
      %p262 = scmp.ne.s32.totalorder %s248, %s249
      %p263 = scmp.eq.s32.totalorder %s27, 1
      %p264 = por %p262, %p263
      %p266 = scmp.ne.s32.totalorder %s249, %s265
      %p267 = scmp.eq.s32.totalorder %s27, 0
      %p268 = por %p266, %p267
      %s270 = sadd.s32 %s269, 1
      %p273 = scmp.eq.s32.totalorder %s21, 1
      %p274 = scmp.ne.s32.totalorder %s269, %s271
      %p275 = scmp.eq.s32.totalorder %s21, 0
      %p276 = por %p274, %p275
      %p277 = scmp.ne.s32.totalorder %s269, %s271
      %p278 = scmp.eq.s32.totalorder %s26, 1
      %p279 = por %p277, %p278
      %p280 = scmp.ne.s32.totalorder %s271, %s272
      %p281 = scmp.eq.s32.totalorder %s26, 0
      %p282 = por %p280, %p281
      %p283 = scmp.ne.s32.totalorder %s271, %s272
      %p284 = scmp.eq.s32.totalorder %s27, 1
      %p285 = por %p283, %p284
      %p287 = scmp.ne.s32.totalorder %s272, %s286
      %p288 = scmp.eq.s32.totalorder %s27, 0
      %p289 = por %p287, %p288
      %s291 = sadd.s32 %s290, 1
      %p294 = scmp.eq.s32.totalorder %s21, 1
      %p295 = scmp.ne.s32.totalorder %s290, %s292
      %p296 = scmp.eq.s32.totalorder %s21, 0
      %p297 = por %p295, %p296
      %p298 = scmp.ne.s32.totalorder %s290, %s292
      %p299 = scmp.eq.s32.totalorder %s26, 1
      %p300 = por %p298, %p299
      %p301 = scmp.ne.s32.totalorder %s292, %s293
      %p302 = scmp.eq.s32.totalorder %s26, 0
      %p303 = por %p301, %p302
      %p304 = scmp.ne.s32.totalorder %s292, %s293
      %p305 = scmp.eq.s32.totalorder %s27, 1
      %p306 = por %p304, %p305
      %p308 = scmp.ne.s32.totalorder %s293, %s307
      %p309 = scmp.eq.s32.totalorder %s27, 0
      %p310 = por %p308, %p309
      %s312 = sadd.s32 %s311, 1
      %p315 = scmp.eq.s32.totalorder %s21, 1
      %p316 = scmp.ne.s32.totalorder %s311, %s313
      %p317 = scmp.eq.s32.totalorder %s21, 0
      %p318 = por %p316, %p317
      %p319 = scmp.ne.s32.totalorder %s311, %s313
      %p320 = scmp.eq.s32.totalorder %s26, 1
      %p321 = por %p319, %p320
      %p322 = scmp.ne.s32.totalorder %s313, %s314
      %p323 = scmp.eq.s32.totalorder %s26, 0
      %p324 = por %p322, %p323
      %p325 = scmp.ne.s32.totalorder %s313, %s314
      %p326 = scmp.eq.s32.totalorder %s27, 1
      %p327 = por %p325, %p326
      %p329 = scmp.ne.s32.totalorder %s314, %s328
      %p330 = scmp.eq.s32.totalorder %s27, 0
      %p331 = por %p329, %p330
      %p332 = scmp.le.s32.totalorder 1, %s21
      %p333 = scmp.lt.s32.totalorder %s21, 3
      %p334 = pnand %p332, %p333
      %p335 = pneg %p334
      // Predicated region
      $region9: #{tpu_custom_call.1} parent=5 // pred_check
        _
      $region10: #{tpu_custom_call.1} parent=5 // pred_check_branch
        %337 = sbr.rel (%p334) target = $region12
      $region11: #{tpu_custom_call.1} parent=5 // pred_region
        %s338 = ssub.s32 %s21, 1
        // Predicated region
        $region13: #{tpu_custom_call.1} parent=11 // pred_check
          %p339 = pneg %p42
        $region14: #{tpu_custom_call.1} parent=11 // pred_check_branch
          %341 = sbr.rel (%p339) target = $region16
        $region15: #{tpu_custom_call.1} parent=11 // pred_region
          _
        $region16: #{tpu_custom_call.1} parent=11 // pred_fallthru
          _
        // Predicated region
        $region17: #{tpu_custom_call.1} parent=11 // pred_check
          %p342 = pneg %p63
        $region18: #{tpu_custom_call.1} parent=11 // pred_check_branch
          %344 = sbr.rel (%p342) target = $region20
        $region19: #{tpu_custom_call.1} parent=11 // pred_region
          %s346 = ssub.s32 256, 256
          %347 = vsyncadd [#allocation4], %s346
          %s348 = sshll.u32 [#allocation3], 4
          %s349 = int_to_ptr.vmem [resolvable:$true] %s348
          %354 = dma.hbm_to_vmem [thread:$0]  %s1, 256, %s349, [#allocation4], 128, 128, 8
        $region20: #{tpu_custom_call.1} parent=11 // pred_fallthru
          _
        // Predicated region
        $region21: #{tpu_custom_call.1} parent=11 // pred_check
          %p355 = pneg %p84
        $region22: #{tpu_custom_call.1} parent=11 // pred_check_branch
          %357 = sbr.rel (%p355) target = $region24
        $region23: #{tpu_custom_call.1} parent=11 // pred_region
          %s359 = ssub.s32 256, 256
          %360 = vsyncadd [#allocation7], %s359
          %s361 = sshll.u32 [#allocation6], 4
          %s362 = int_to_ptr.vmem [resolvable:$true] %s361
          %367 = dma.hbm_to_vmem [thread:$0]  %s2, 256, %s362, [#allocation7], 128, 128, 8
        $region24: #{tpu_custom_call.1} parent=11 // pred_fallthru
          _
        // Predicated region
        $region25: #{tpu_custom_call.1} parent=11 // pred_check
          %p368 = pneg %p105
        $region26: #{tpu_custom_call.1} parent=11 // pred_check_branch
          %370 = sbr.rel (%p368) target = $region28
        $region27: #{tpu_custom_call.1} parent=11 // pred_region
          _
        $region28: #{tpu_custom_call.1} parent=11 // pred_fallthru
          _
        // Predicated region
        $region29: #{tpu_custom_call.1} parent=11 // pred_check
          %p371 = pneg %p282
        $region30: #{tpu_custom_call.1} parent=11 // pred_check_branch
          %373 = sbr.rel (%p371) target = $region32
        $region31: #{tpu_custom_call.1} parent=11 // pred_region
          _
        $region32: #{tpu_custom_call.1} parent=11 // pred_fallthru
          _
        // Predicated region
        $region33: #{tpu_custom_call.1} parent=11 // pred_check
          %p374 = pneg %p303
        $region34: #{tpu_custom_call.1} parent=11 // pred_check_branch
          %376 = sbr.rel (%p374) target = $region36
        $region35: #{tpu_custom_call.1} parent=11 // pred_region
          _
        $region36: #{tpu_custom_call.1} parent=11 // pred_fallthru
          _
      $region12: #{tpu_custom_call.1} parent=5 // pred_fallthru
        _
      %p377 = scmp.lt.s32.totalorder %s21, 2
      // Predicated region
      $region37: #{tpu_custom_call.1} parent=5 // pred_check
        %p378 = pneg %p377
      $region38: #{tpu_custom_call.1} parent=5 // pred_check_branch
        %380 = sbr.rel (%p378) target = $region40
      $region39: #{tpu_custom_call.1} parent=5 // pred_region
        // Predicated region
        $region41: #{tpu_custom_call.1} parent=39 // pred_check
          %p381 = pneg %p125
        $region42: #{tpu_custom_call.1} parent=39 // pred_check_branch
          %383 = sbr.rel (%p381) target = $region44
        $region43: #{tpu_custom_call.1} parent=39 // pred_region
          %p384 = scmp.lt.s32.totalorder %s21, 1
          %s385 = scalar_select %p384, %s21, 1
          %s386 = scalar_lea.vmem %s4, %s385
        $region44: #{tpu_custom_call.1} parent=39 // pred_fallthru
          _
        // Predicated region
        $region45: #{tpu_custom_call.1} parent=39 // pred_check
          %p387 = pneg %p151
        $region46: #{tpu_custom_call.1} parent=39 // pred_check_branch
          %389 = sbr.rel (%p387) target = $region48
        $region47: #{tpu_custom_call.1} parent=39 // pred_region
          %p390 = scmp.lt.s32.totalorder %s21, 1
          %s391 = scalar_select %p390, %s21, 1
          %s392 = smul.addr %s391, 16
          %s393 = smul.addr %s392, 4
          %s394 = scalar_lea.vmem %s5, %s393
        $region48: #{tpu_custom_call.1} parent=39 // pred_fallthru
          _
        // Predicated region
        $region49: #{tpu_custom_call.1} parent=39 // pred_check
          %p395 = pneg %p177
        $region50: #{tpu_custom_call.1} parent=39 // pred_check_branch
          %397 = sbr.rel (%p395) target = $region52
        $region51: #{tpu_custom_call.1} parent=39 // pred_region
          %p398 = scmp.lt.s32.totalorder %s21, 1
          %s399 = scalar_select %p398, %s21, 1
          %s400 = smul.addr %s399, 8
          %s401 = smul.addr %s400, 4
          %s402 = scalar_lea.vmem %s6, %s401
        $region52: #{tpu_custom_call.1} parent=39 // pred_fallthru
          _
        // Predicated region
        $region53: #{tpu_custom_call.1} parent=39 // pred_check
          %p403 = pneg %p203
        $region54: #{tpu_custom_call.1} parent=39 // pred_check_branch
          %405 = sbr.rel (%p403) target = $region56
        $region55: #{tpu_custom_call.1} parent=39 // pred_region
          %p406 = scmp.lt.s32.totalorder %s21, 1
          %s407 = scalar_select %p406, %s21, 1
          %s408 = scalar_lea.vmem %s7, %s407
        $region56: #{tpu_custom_call.1} parent=39 // pred_fallthru
          _
        // Predicated region
        $region57: #{tpu_custom_call.1} parent=39 // pred_check
          %p409 = pneg %p229
        $region58: #{tpu_custom_call.1} parent=39 // pred_check_branch
          %411 = sbr.rel (%p409) target = $region60
        $region59: #{tpu_custom_call.1} parent=39 // pred_region
          %s412 = sand.u32 %s21, 1
          %s413 = scalar_lea.sflag [#allocation4], %s412
          %s414 = sand.u32 %s219, 1
          %s415 = smul.addr %s414, 64
          %s416 = scalar_lea.vmem [#allocation8], %s415
          %s418 = ssub.s32 1024, 1024
          %419 = vsyncadd %s413, %s418
          %s420 = smul.addr %s21, 16
          %s421 = smul.addr %s420, 64
          %s422 = scalar_lea.hbm %s8, %s421
          %s423 = sshll.u32 %s416, 4
          %s424 = int_to_ptr.vmem [resolvable:$true] %s423
          %429 = dma.hbm_to_vmem [thread:$0]  %s422, 1024, %s424, %s413, 128, 128, 8
        $region60: #{tpu_custom_call.1} parent=39 // pred_fallthru
          _
        // Predicated region
        $region61: #{tpu_custom_call.1} parent=39 // pred_check
          %p430 = pneg %p255
        $region62: #{tpu_custom_call.1} parent=39 // pred_check_branch
          %432 = sbr.rel (%p430) target = $region64
        $region63: #{tpu_custom_call.1} parent=39 // pred_region
          %p433 = scmp.lt.s32.totalorder %s21, 1
          %s434 = scalar_select %p433, %s21, 1
          %s435 = smul.addr %s434, 16
          %s436 = smul.addr %s435, 4
          %s437 = scalar_lea.vmem %s9, %s436
        $region64: #{tpu_custom_call.1} parent=39 // pred_fallthru
          _
      $region40: #{tpu_custom_call.1} parent=5 // pred_fallthru
        _
      %p438 = scmp.le.s32.totalorder 1, %s21
      %p439 = scmp.lt.s32.totalorder %s21, 3
      %p440 = pnand %p438, %p439
      %p441 = pneg %p440
      // Predicated region
      $region65: #{tpu_custom_call.1} parent=5 // pred_check
        _
      $region66: #{tpu_custom_call.1} parent=5 // pred_check_branch
        %443 = sbr.rel (%p440) target = $region68
      $region67: #{tpu_custom_call.1} parent=5 // pred_region
        %s444 = ssub.s32 %s21, 1
        // Predicated region
        $region69: #{tpu_custom_call.1} parent=67 // pred_check
          %p445 = pneg %p63
        $region70: #{tpu_custom_call.1} parent=67 // pred_check_branch
          %447 = sbr.rel (%p445) target = $region72
        $region71: #{tpu_custom_call.1} parent=67 // pred_region
          %448 = dma.done [#allocation4], 256
        $region72: #{tpu_custom_call.1} parent=67 // pred_fallthru
          _
        // Predicated region
        $region73: #{tpu_custom_call.1} parent=67 // pred_check
          %p449 = pneg %p84
        $region74: #{tpu_custom_call.1} parent=67 // pred_check_branch
          %451 = sbr.rel (%p449) target = $region76
        $region75: #{tpu_custom_call.1} parent=67 // pred_region
          %452 = dma.done [#allocation7], 256
        $region76: #{tpu_custom_call.1} parent=67 // pred_fallthru
          _
        %s453 = sand.u32 %s26, 1
        %s454 = scalar_lea.sflag [#allocation4], %s453
        %s455 = sand.u32 %s222, 1
        %s456 = smul.addr %s455, 64
        %s457 = scalar_lea.vmem [#allocation8], %s456
        // Predicated region
        $region77: #{tpu_custom_call.1} parent=67 // pred_check
          %p458 = pneg %p235
        $region78: #{tpu_custom_call.1} parent=67 // pred_check_branch
          %460 = sbr.rel (%p458) target = $region80
        $region79: #{tpu_custom_call.1} parent=67 // pred_region
          %461 = dma.done %s454, 1024
        $region80: #{tpu_custom_call.1} parent=67 // pred_fallthru
          _
        %p462 = pneg %p42
        %p463 = pneg %p39
        %p464 = pneg %p63
        %p465 = pneg %p60
        %p466 = pneg %p84
        %p467 = pneg %p81
        %p468 = pneg %p105
        %p469 = pneg %p102
        %p470 = scmp.lt.s32.totalorder %s26, 1
        %s471 = scalar_select %p470, %s26, 1
        %s472 = scalar_lea.vmem %s4, %s471
        %p473 = pneg %p131
        %p474 = pneg %p128
        %p475 = scmp.lt.s32.totalorder %s26, 1
        %s476 = scalar_select %p475, %s26, 1
        %s477 = smul.addr %s476, 16
        %s478 = smul.addr %s477, 4
        %s479 = scalar_lea.vmem %s5, %s478
        %p480 = pneg %p157
        %p481 = pneg %p154
        %p482 = scmp.lt.s32.totalorder %s26, 1
        %s483 = scalar_select %p482, %s26, 1
        %s484 = smul.addr %s483, 8
        %s485 = smul.addr %s484, 4
        %s486 = scalar_lea.vmem %s6, %s485
        %p487 = pneg %p183
        %p488 = pneg %p180
        %p489 = scmp.lt.s32.totalorder %s26, 1
        %s490 = scalar_select %p489, %s26, 1
        %s491 = scalar_lea.vmem %s7, %s490
        %p492 = pneg %p209
        %p493 = pneg %p206
        %s494 = sand.u32 %s26, 1
        %s495 = scalar_lea.sflag [#allocation4], %s494
        %s496 = sand.u32 %s222, 1
        %s497 = smul.addr %s496, 64
        %s498 = scalar_lea.vmem [#allocation8], %s497
        %p499 = pneg %p235
        %p500 = pneg %p232
        %p501 = scmp.lt.s32.totalorder %s26, 1
        %s502 = scalar_select %p501, %s26, 1
        %s503 = smul.addr %s502, 16
        %s504 = smul.addr %s503, 4
        %s505 = scalar_lea.vmem %s9, %s504
        %p506 = pneg %p261
        %p507 = pneg %p258
        %p508 = pneg %p282
        %p509 = pneg %p279
        %p510 = pneg %p303
        %p511 = pneg %p300
        %p512 = pneg %p324
        %p513 = pneg %p321
        %p514 = scmp.lt.s32.totalorder %s26, 1
        %s515 = scalar_select %p514, %s26, 1
        %s516 = scalar_lea.vmem %s4, %s515
        %p517 = scmp.lt.s32.totalorder %s26, 1
        %s518 = scalar_select %p517, %s26, 1
        %s519 = smul.addr %s518, 16
        %s520 = smul.addr %s519, 4
        %s521 = scalar_lea.vmem %s5, %s520
        %p522 = scmp.lt.s32.totalorder %s26, 1
        %s523 = scalar_select %p522, %s26, 1
        %s524 = smul.addr %s523, 8
        %s525 = smul.addr %s524, 4
        %s526 = scalar_lea.vmem %s6, %s525
        %p527 = scmp.lt.s32.totalorder %s26, 1
        %s528 = scalar_select %p527, %s26, 1
        %s529 = scalar_lea.vmem %s7, %s528
        %p530 = scmp.lt.s32.totalorder %s26, 1
        %s531 = scalar_select %p530, %s26, 1
        %s532 = smul.addr %s531, 16
        %s533 = smul.addr %s532, 4
        %s534 = scalar_lea.vmem %s9, %s533
        %p537 = scmp.eq.s32.totalorder %s26, 0
        // Predicated region
        $region81: #{tpu_custom_call.1} parent=67 // pred_check
          %p538 = pneg %p537
        $region82: #{tpu_custom_call.1} parent=67 // pred_check_branch
          %540 = sbr.rel (%p538) target = $region84
        $region83: #{tpu_custom_call.1} parent=67 // pred_region
          %v541 = vld [vmem:[%s0] sm:$0xf]
          %v542 = vld [vmem:[%s0 + $0x4] sm:$0xf]
          %v543 = vunpack.c.l.bf16 %v541
          %v544 = vunpack.c.l.bf16 %v542
          %vm545 = vcmask 523264
          %546 = vst.msk [vmem:[#allocation2] sm:$0xff] %vm545, %v543
          %547 = vst.msk [vmem:[#allocation2 + $0x8] sm:$0xff] %vm545, %v544
        $region84: #{tpu_custom_call.1} parent=67 // pred_fallthru
          _
        %v548 = vld [vmem:[#allocation2] sm:$0xff]
        %v549 = vld [vmem:[#allocation2 + $0x8] sm:$0xff]
        %v550 = vld [vmem:[%s516] sm:$0x1]
        %v551 = vmul.f32 %v548, %v548
        %v552 = vmul.f32 %v549, %v549
        %vm553 = vcmask 523264
        %v554 = vsel %vm553, %v551, 0.0
        %555 = vadd.xlane.f32.xlu0 %v554
        %v556 = vpop.xlane.xlu0 %555
        %v557 = vsel %vm553, %v552, 0.0
        %558 = vadd.xlane.f32.xlu0 %v557
        %v559 = vpop.xlane.xlu0 %558
        %v560 = vrcp.pop 64.0
        %v561 = vmul.f32 %v556, %v560
        %v562 = vmul.f32 %v559, %v560
        %v563 = vadd.f32 %v561, 1e-05
        %v564 = vadd.f32 %v562, 1e-05
        %v565 = vrsqrt.pop %v563
        %v566 = vrsqrt.pop %v564
        %v567 = vmul.f32 %v548, %v565
        %v568 = vmul.f32 %v549, %v566
        %v570 = vlaneseq
        %v571 = vshrl.u32 %v570, 7
        %v572 = vsub.s32 0, %v571
        %v573 = vrot.slane %v550, %v572
        %v575 = vmul.f32 %v567, %v573
        %v576 = vmul.f32 %v568, %v573
        %v577 = vpack.c.bf16 %v576, %v575
        %v578 = vld [vmem:[%s521] sm:$0xff]
        %v579 = vld [vmem:[%s521 + $0x8] sm:$0xff]
        %v580 = vld [vmem:[%s521 + $0x10] sm:$0xff]
        %v581 = vld [vmem:[%s521 + $0x18] sm:$0xff]
        %v582 = vld [vmem:[%s521 + $0x20] sm:$0xff]
        %v583 = vld [vmem:[%s521 + $0x28] sm:$0xff]
        %v584 = vld [vmem:[%s521 + $0x30] sm:$0xff]
        %v585 = vld [vmem:[%s521 + $0x38] sm:$0xff]
        %v594 = vunpack.c.l.b16 %v578
        %v595 = vunpack.c.h.b16 %v578
        %v596 = vunpack.c.l.b16 %v579
        %v597 = vunpack.c.h.b16 %v579
        %v598 = vunpack.c.l.b16 %v580
        %v599 = vunpack.c.h.b16 %v580
        %v600 = vunpack.c.l.b16 %v581
        %v601 = vunpack.c.h.b16 %v581
        %v602 = vunpack.c.l.b16 %v582
        %v603 = vunpack.c.h.b16 %v582
        %v604 = vunpack.c.l.b16 %v583
        %v605 = vunpack.c.h.b16 %v583
        %v606 = vunpack.c.l.b16 %v584
        %v607 = vunpack.c.h.b16 %v584
        %v608 = vunpack.c.l.b16 %v585
        %v609 = vunpack.c.h.b16 %v585
        %v610 = vpack.c.b16 %v596, %v594
        %v611 = vpack.c.b16 %v597, %v595
        %v612 = vpack.c.b16 %v600, %v598
        %v613 = vpack.c.b16 %v601, %v599
        %v614 = vpack.c.b16 %v604, %v602
        %v615 = vpack.c.b16 %v605, %v603
        %v616 = vpack.c.b16 %v608, %v606
        %v617 = vpack.c.b16 %v609, %v607
        %v627 = vsel %vm553, %v577, 0
        %629 = vmatprep.subr.bf16.mxu0 %v611
        %630 = vmatpush1.bf16.msra.mxu0 %v610
        %631 = vmatprep.subr.bf16.mxu0 %v613
        %632 = vmatpush1.bf16.msra.mxu0 %v612
        %633 = vmatprep.subr.bf16.mxu0 %v615
        %634 = vmatpush1.bf16.msra.mxu0 %v614
        %635 = vmatprep.subr.bf16.mxu0 %v617
        %636 = vmatpush1.bf16.msra.mxu0 %v616
        %637 = vmatprep.subr.bf16.mxu0 0
        %638 = vmatpush1.bf16.msra.mxu0 0
        %639 = vmatprep.subr.bf16.mxu0 0
        %640 = vmatpush1.bf16.msra.mxu0 0
        %641 = vmatprep.subr.bf16.mxu0 0
        %642 = vmatpush1.bf16.msra.mxu0 0
        %643 = vmatprep.subr.bf16.mxu0 0
        %644 = vmatpush1.bf16.msra.mxu0 0
        %645 = vmatprep.subr.bf16.mxu0 0
        %646 = vmatpush1.bf16.msra.mxu0 0
        %647 = vmatprep.subr.bf16.mxu0 0
        %648 = vmatpush1.bf16.msra.mxu0 0
        %649 = vmatprep.subr.bf16.mxu0 0
        %650 = vmatpush1.bf16.msra.mxu0 0
        %651 = vmatprep.subr.bf16.mxu0 0
        %652 = vmatpush1.bf16.msra.mxu0 0
        %653 = vmatprep.subr.bf16.mxu0 0
        %654 = vmatpush1.bf16.msra.mxu0 0
        %655 = vmatprep.subr.bf16.mxu0 0
        %656 = vmatpush1.bf16.msra.mxu0 0
        %657 = vmatprep.subr.bf16.mxu0 0
        %658 = vmatpush1.bf16.msra.mxu0 0
        %659 = vmatprep.subr.bf16.mxu0 0
        %660 = vmatpush1.bf16.msra.mxu0 0
        %661 = vmatprep.mubr.bf16.mxu0 0
        %662 = vmatmul.mubr.bf16.gmra.mrb[0].mxu0 %v627
        %v663 = vpop.f32.mrb[0].mxu0
        %v664 = vadd.f32 0.0, %v663
        %v665 = vpop.f32.mrb[0].mxu0
        %v666 = vadd.f32 0.0, %v665
        %v667 = vpop.f32.mrb[0].mxu0
        %v668 = vadd.f32 0.0, %v667
        %v669 = vpop.f32.mrb[0].mxu0
        %v670 = vadd.f32 0.0, %v669
        %671 = vdwg.mxu0
        %v672 = vld [vmem:[#allocation3] sm:$0xff]
        %v673 = vld [vmem:[#allocation3 + $0x8] sm:$0xff]
        %v674 = vld [vmem:[#allocation6] sm:$0xff]
        %v675 = vld [vmem:[#allocation6 + $0x8] sm:$0xff]
        %v676 = vmul.f32 %v664, %v672
        %v677 = vmul.f32 %v668, %v673
        %680 = vrot.lane.b32.xlu0 %v674, 64
        %v681 = vpop.permute.xlu0 %680
        %682 = vrot.lane.b32.xlu0 %v675, 64
        %v683 = vpop.permute.xlu0 %682
        %v686 = vmul.f32 %v664, %v681
        %v687 = vmul.f32 %v668, %v683
        %690 = vrot.lane.b32.xlu0 %v686, 64
        %v691 = vpop.permute.xlu0 %690
        %692 = vrot.lane.b32.xlu0 %v687, 64
        %v693 = vpop.permute.xlu0 %692
        %v696 = vadd.f32 %v676, %v691
        %v697 = vadd.f32 %v677, %v693
        %v698 = vmul.f32 %v666, %v672
        %v699 = vmul.f32 %v670, %v673
        %700 = vrot.lane.b32.xlu0 %v674, 32
        %v701 = vpop.permute.xlu0 %700
        %702 = vrot.lane.b32.xlu0 %v675, 32
        %v703 = vpop.permute.xlu0 %702
        %v706 = vmul.f32 %v666, %v701
        %v707 = vmul.f32 %v670, %v703
        %710 = vrot.lane.b32.xlu0 %v706, 96
        %v711 = vpop.permute.xlu0 %710
        %712 = vrot.lane.b32.xlu0 %v707, 96
        %v713 = vpop.permute.xlu0 %712
        %v716 = vadd.f32 %v698, %v711
        %v717 = vadd.f32 %v699, %v713
        %v718 = vpack.c.bf16 %v697, %v696
        %v719 = vpack.c.bf16 %v717, %v716
        %v720 = vpack.c.bf16 %v670, %v666
        %v722 = vunpack.c.l.b16 %v718
        %v723 = vunpack.c.h.b16 %v718
        %v724 = vpack.c.b16 %v722, %v722
        %v725 = vpack.c.b16 %v723, %v723
        %726 = vrot.lane.b32.xlu0 %v724, 112
        %v727 = vpop.permute.xlu0 %726
        %728 = vrot.lane.b32.xlu0 %v725, 112
        %v729 = vpop.permute.xlu0 %728
        %vm730 = vcmask 1043456
        %v733 = vsel %vm730, %v724, %v727
        %v736 = vsel %vm730, %v725, %v729
        %739 = vrot.lane.b32.xlu0 %v733, 96
        %v740 = vpop.permute.xlu0 %739
        %741 = vrot.lane.b32.xlu0 %v736, 96
        %v742 = vpop.permute.xlu0 %741
        %v744 = vunpack.c.l.b16 %v719
        %v745 = vunpack.c.h.b16 %v719
        %v746 = vpack.c.b16 %v744, %v744
        %v747 = vpack.c.b16 %v745, %v745
        %748 = vrot.lane.b32.xlu0 %v746, 112
        %v749 = vpop.permute.xlu0 %748
        %750 = vrot.lane.b32.xlu0 %v747, 112
        %v751 = vpop.permute.xlu0 %750
        %v753 = vunpack.c.l.b16 %v720
        %v754 = vunpack.c.h.b16 %v720
        %v755 = vpack.c.b16 %v753, %v753
        %v756 = vpack.c.b16 %v754, %v754
        %757 = vrot.lane.b32.xlu0 %v755, 112
        %v758 = vpop.permute.xlu0 %757
        %759 = vrot.lane.b32.xlu0 %v756, 112
        %v760 = vpop.permute.xlu0 %759
        %v761 = vld [vmem:[%s3] sm:$0xff]
        %v762 = vld [vmem:[%s3 + $0x8] sm:$0xff]
        %vm763 = vcmask 130048
        %v764 = vsel %vm763, %v733, 0
        %v767 = vsel %vm763, %v746, 0
        %769 = vmatprep.subr.bf16.mxu0 0
        %770 = vmatpush1.bf16.xpose.msra.mxu0 %v767
        %771 = vmatprep.subr.bf16.mxu0 0
        %772 = vmatpush1.bf16.xpose.msra.mxu0 0
        %773 = vmatprep.subr.bf16.mxu0 0
        %774 = vmatpush1.bf16.xpose.msra.mxu0 0
        %775 = vmatprep.subr.bf16.mxu0 0
        %776 = vmatpush1.bf16.xpose.msra.mxu0 0
        %777 = vmatprep.subr.bf16.mxu0 0
        %778 = vmatpush1.bf16.xpose.msra.mxu0 0
        %779 = vmatprep.subr.bf16.mxu0 0
        %780 = vmatpush1.bf16.xpose.msra.mxu0 0
        %781 = vmatprep.subr.bf16.mxu0 0
        %782 = vmatpush1.bf16.xpose.msra.mxu0 0
        %783 = vmatprep.subr.bf16.mxu0 0
        %784 = vmatpush1.bf16.xpose.msra.mxu0 0
        %785 = vmatprep.subr.bf16.mxu0 0
        %786 = vmatpush1.bf16.xpose.msra.mxu0 0
        %787 = vmatprep.subr.bf16.mxu0 0
        %788 = vmatpush1.bf16.xpose.msra.mxu0 0
        %789 = vmatprep.subr.bf16.mxu0 0
        %790 = vmatpush1.bf16.xpose.msra.mxu0 0
        %791 = vmatprep.subr.bf16.mxu0 0
        %792 = vmatpush1.bf16.xpose.msra.mxu0 0
        %793 = vmatprep.subr.bf16.mxu0 0
        %794 = vmatpush1.bf16.xpose.msra.mxu0 0
        %795 = vmatprep.subr.bf16.mxu0 0
        %796 = vmatpush1.bf16.xpose.msra.mxu0 0
        %797 = vmatprep.subr.bf16.mxu0 0
        %798 = vmatpush1.bf16.xpose.msra.mxu0 0
        %799 = vmatprep.subr.bf16.mxu0 0
        %800 = vmatpush1.bf16.xpose.msra.mxu0 0
        %801 = vmatprep.mubr.bf16.mxu0 0
        %802 = vmatmul.mubr.bf16.gmra.mrb[0].mxu0 %v764
        %v803 = vpop.f32.mrb[0].mxu0
        %v804 = vadd.f32 %v761, %v803
        %v805 = vpop.f32.mrb[0].mxu0
        %v806 = vpop.f32.mrb[0].mxu0
        %v807 = vadd.f32 %v762, %v806
        %v808 = vpop.f32.mrb[0].mxu0
        %809 = vdwg.mxu0
        %v811 = vsel %vm763, %v740, 0
        %v814 = vsel %vm763, %v749, 0
        %816 = vmatprep.subr.bf16.mxu0 0
        %817 = vmatpush1.bf16.xpose.msra.mxu0 %v814
        %818 = vmatprep.subr.bf16.mxu0 0
        %819 = vmatpush1.bf16.xpose.msra.mxu0 0
        %820 = vmatprep.subr.bf16.mxu0 0
        %821 = vmatpush1.bf16.xpose.msra.mxu0 0
        %822 = vmatprep.subr.bf16.mxu0 0
        %823 = vmatpush1.bf16.xpose.msra.mxu0 0
        %824 = vmatprep.subr.bf16.mxu0 0
        %825 = vmatpush1.bf16.xpose.msra.mxu0 0
        %826 = vmatprep.subr.bf16.mxu0 0
        %827 = vmatpush1.bf16.xpose.msra.mxu0 0
        %828 = vmatprep.subr.bf16.mxu0 0
        %829 = vmatpush1.bf16.xpose.msra.mxu0 0
        %830 = vmatprep.subr.bf16.mxu0 0
        %831 = vmatpush1.bf16.xpose.msra.mxu0 0
        %832 = vmatprep.subr.bf16.mxu0 0
        %833 = vmatpush1.bf16.xpose.msra.mxu0 0
        %834 = vmatprep.subr.bf16.mxu0 0
        %835 = vmatpush1.bf16.xpose.msra.mxu0 0
        %836 = vmatprep.subr.bf16.mxu0 0
        %837 = vmatpush1.bf16.xpose.msra.mxu0 0
        %838 = vmatprep.subr.bf16.mxu0 0
        %839 = vmatpush1.bf16.xpose.msra.mxu0 0
        %840 = vmatprep.subr.bf16.mxu0 0
        %841 = vmatpush1.bf16.xpose.msra.mxu0 0
        %842 = vmatprep.subr.bf16.mxu0 0
        %843 = vmatpush1.bf16.xpose.msra.mxu0 0
        %844 = vmatprep.subr.bf16.mxu0 0
        %845 = vmatpush1.bf16.xpose.msra.mxu0 0
        %846 = vmatprep.subr.bf16.mxu0 0
        %847 = vmatpush1.bf16.xpose.msra.mxu0 0
        %848 = vmatprep.mubr.bf16.mxu0 0
        %849 = vmatmul.mubr.bf16.gmra.mrb[0].mxu0 %v811
        %v850 = vpop.f32.mrb[0].mxu0
        %v851 = vadd.f32 %v761, %v850
        %v852 = vpop.f32.mrb[0].mxu0
        %v853 = vpop.f32.mrb[0].mxu0
        %v854 = vadd.f32 %v762, %v853
        %v855 = vpop.f32.mrb[0].mxu0
        %856 = vdwg.mxu0
        %v857 = vsel %vm763, %v736, 0
        %v860 = vsel %vm763, %v747, 0
        %862 = vmatprep.subr.bf16.mxu0 0
        %863 = vmatpush1.bf16.xpose.msra.mxu0 %v860
        %864 = vmatprep.subr.bf16.mxu0 0
        %865 = vmatpush1.bf16.xpose.msra.mxu0 0
        %866 = vmatprep.subr.bf16.mxu0 0
        %867 = vmatpush1.bf16.xpose.msra.mxu0 0
        %868 = vmatprep.subr.bf16.mxu0 0
        %869 = vmatpush1.bf16.xpose.msra.mxu0 0
        %870 = vmatprep.subr.bf16.mxu0 0
        %871 = vmatpush1.bf16.xpose.msra.mxu0 0
        %872 = vmatprep.subr.bf16.mxu0 0
        %873 = vmatpush1.bf16.xpose.msra.mxu0 0
        %874 = vmatprep.subr.bf16.mxu0 0
        %875 = vmatpush1.bf16.xpose.msra.mxu0 0
        %876 = vmatprep.subr.bf16.mxu0 0
        %877 = vmatpush1.bf16.xpose.msra.mxu0 0
        %878 = vmatprep.subr.bf16.mxu0 0
        %879 = vmatpush1.bf16.xpose.msra.mxu0 0
        %880 = vmatprep.subr.bf16.mxu0 0
        %881 = vmatpush1.bf16.xpose.msra.mxu0 0
        %882 = vmatprep.subr.bf16.mxu0 0
        %883 = vmatpush1.bf16.xpose.msra.mxu0 0
        %884 = vmatprep.subr.bf16.mxu0 0
        %885 = vmatpush1.bf16.xpose.msra.mxu0 0
        %886 = vmatprep.subr.bf16.mxu0 0
        %887 = vmatpush1.bf16.xpose.msra.mxu0 0
        %888 = vmatprep.subr.bf16.mxu0 0
        %889 = vmatpush1.bf16.xpose.msra.mxu0 0
        %890 = vmatprep.subr.bf16.mxu0 0
        %891 = vmatpush1.bf16.xpose.msra.mxu0 0
        %892 = vmatprep.subr.bf16.mxu0 0
        %893 = vmatpush1.bf16.xpose.msra.mxu0 0
        %894 = vmatprep.mubr.bf16.mxu0 0
        %895 = vmatmul.mubr.bf16.gmra.mrb[0].mxu0 %v857
        %v896 = vpop.f32.mrb[0].mxu0
        %v897 = vadd.f32 %v761, %v896
        %v898 = vpop.f32.mrb[0].mxu0
        %v899 = vpop.f32.mrb[0].mxu0
        %v900 = vadd.f32 %v762, %v899
        %v901 = vpop.f32.mrb[0].mxu0
        %902 = vdwg.mxu0
        %v904 = vsel %vm763, %v742, 0
        %v907 = vsel %vm763, %v751, 0
        %909 = vmatprep.subr.bf16.mxu0 0
        %910 = vmatpush1.bf16.xpose.msra.mxu0 %v907
        %911 = vmatprep.subr.bf16.mxu0 0
        %912 = vmatpush1.bf16.xpose.msra.mxu0 0
        %913 = vmatprep.subr.bf16.mxu0 0
        %914 = vmatpush1.bf16.xpose.msra.mxu0 0
        %915 = vmatprep.subr.bf16.mxu0 0
        %916 = vmatpush1.bf16.xpose.msra.mxu0 0
        %917 = vmatprep.subr.bf16.mxu0 0
        %918 = vmatpush1.bf16.xpose.msra.mxu0 0
        %919 = vmatprep.subr.bf16.mxu0 0
        %920 = vmatpush1.bf16.xpose.msra.mxu0 0
        %921 = vmatprep.subr.bf16.mxu0 0
        %922 = vmatpush1.bf16.xpose.msra.mxu0 0
        %923 = vmatprep.subr.bf16.mxu0 0
        %924 = vmatpush1.bf16.xpose.msra.mxu0 0
        %925 = vmatprep.subr.bf16.mxu0 0
        %926 = vmatpush1.bf16.xpose.msra.mxu0 0
        %927 = vmatprep.subr.bf16.mxu0 0
        %928 = vmatpush1.bf16.xpose.msra.mxu0 0
        %929 = vmatprep.subr.bf16.mxu0 0
        %930 = vmatpush1.bf16.xpose.msra.mxu0 0
        %931 = vmatprep.subr.bf16.mxu0 0
        %932 = vmatpush1.bf16.xpose.msra.mxu0 0
        %933 = vmatprep.subr.bf16.mxu0 0
        %934 = vmatpush1.bf16.xpose.msra.mxu0 0
        %935 = vmatprep.subr.bf16.mxu0 0
        %936 = vmatpush1.bf16.xpose.msra.mxu0 0
        %937 = vmatprep.subr.bf16.mxu0 0
        %938 = vmatpush1.bf16.xpose.msra.mxu0 0
        %939 = vmatprep.subr.bf16.mxu0 0
        %940 = vmatpush1.bf16.xpose.msra.mxu0 0
        %941 = vmatprep.mubr.bf16.mxu0 0
        %942 = vmatmul.mubr.bf16.gmra.mrb[0].mxu0 %v904
        %v943 = vpop.f32.mrb[0].mxu0
        %v944 = vadd.f32 %v761, %v943
        %v945 = vpop.f32.mrb[0].mxu0
        %v946 = vpop.f32.mrb[0].mxu0
        %v947 = vadd.f32 %v762, %v946
        %v948 = vpop.f32.mrb[0].mxu0
        %949 = vdwg.mxu0
        %vm950 = vcmask 64512
        %v951 = vsel %vm950, %v804, -inf
        %952 = vmax.xlane.f32.xlu0 %v951
        %v953 = vpop.xlane.xlu0 %952
        %v954 = vsel %vm950, %v807, -inf
        %955 = vmax.xlane.f32.xlu0 %v954
        %v956 = vpop.xlane.xlu0 %955
        %v957 = vsel %vm950, %v851, -inf
        %958 = vmax.xlane.f32.xlu0 %v957
        %v959 = vpop.xlane.xlu0 %958
        %v960 = vsel %vm950, %v854, -inf
        %961 = vmax.xlane.f32.xlu0 %v960
        %v962 = vpop.xlane.xlu0 %961
        %v963 = vsel %vm950, %v897, -inf
        %964 = vmax.xlane.f32.xlu0 %v963
        %v965 = vpop.xlane.xlu0 %964
        %v966 = vsel %vm950, %v900, -inf
        %967 = vmax.xlane.f32.xlu0 %v966
        %v968 = vpop.xlane.xlu0 %967
        %v969 = vsel %vm950, %v944, -inf
        %970 = vmax.xlane.f32.xlu0 %v969
        %v971 = vpop.xlane.xlu0 %970
        %v972 = vsel %vm950, %v947, -inf
        %973 = vmax.xlane.f32.xlu0 %v972
        %v974 = vpop.xlane.xlu0 %973
        %v975 = vsub.f32 %v804, %v953
        %v976 = vsub.f32 %v807, %v956
        %v977 = vsub.f32 %v851, %v959
        %v978 = vsub.f32 %v854, %v962
        %v979 = vsub.f32 %v897, %v965
        %v980 = vsub.f32 %v900, %v968
        %v981 = vsub.f32 %v944, %v971
        %v982 = vsub.f32 %v947, %v974
        %v983 = vmul.f32 %v975, 1.442695
        %v984 = vpow.pop %v983
        %v985 = vmul.f32 %v976, 1.442695
        %v986 = vpow.pop %v985
        %v987 = vmul.f32 %v977, 1.442695
        %v988 = vpow.pop %v987
        %v989 = vmul.f32 %v978, 1.442695
        %v990 = vpow.pop %v989
        %v991 = vmul.f32 %v979, 1.442695
        %v992 = vpow.pop %v991
        %v993 = vmul.f32 %v980, 1.442695
        %v994 = vpow.pop %v993
        %v995 = vmul.f32 %v981, 1.442695
        %v996 = vpow.pop %v995
        %v997 = vmul.f32 %v982, 1.442695
        %v998 = vpow.pop %v997
        %v999 = vsel %vm950, %v984, 0.0
        %1000 = vadd.xlane.f32.xlu0 %v999
        %v1001 = vpop.xlane.xlu0 %1000
        %v1002 = vsel %vm950, %v986, 0.0
        %1003 = vadd.xlane.f32.xlu0 %v1002
        %v1004 = vpop.xlane.xlu0 %1003
        %v1005 = vsel %vm950, %v988, 0.0
        %1006 = vadd.xlane.f32.xlu0 %v1005
        %v1007 = vpop.xlane.xlu0 %1006
        %v1008 = vsel %vm950, %v990, 0.0
        %1009 = vadd.xlane.f32.xlu0 %v1008
        %v1010 = vpop.xlane.xlu0 %1009
        %v1011 = vsel %vm950, %v992, 0.0
        %1012 = vadd.xlane.f32.xlu0 %v1011
        %v1013 = vpop.xlane.xlu0 %1012
        %v1014 = vsel %vm950, %v994, 0.0
        %1015 = vadd.xlane.f32.xlu0 %v1014
        %v1016 = vpop.xlane.xlu0 %1015
        %v1017 = vsel %vm950, %v996, 0.0
        %1018 = vadd.xlane.f32.xlu0 %v1017
        %v1019 = vpop.xlane.xlu0 %1018
        %v1020 = vsel %vm950, %v998, 0.0
        %1021 = vadd.xlane.f32.xlu0 %v1020
        %v1022 = vpop.xlane.xlu0 %1021
        %v1023 = vrcp.pop %v1001
        %v1024 = vrcp.pop %v1004
        %v1025 = vrcp.pop %v1007
        %v1026 = vrcp.pop %v1010
        %v1027 = vrcp.pop %v1013
        %v1028 = vrcp.pop %v1016
        %v1029 = vrcp.pop %v1019
        %v1030 = vrcp.pop %v1022
        %v1031 = vmul.f32 %v984, %v1023
        %v1032 = vmul.f32 %v986, %v1024
        %v1033 = vmul.f32 %v988, %v1025
        %v1034 = vmul.f32 %v990, %v1026
        %v1035 = vmul.f32 %v992, %v1027
        %v1036 = vmul.f32 %v994, %v1028
        %v1037 = vmul.f32 %v996, %v1029
        %v1038 = vmul.f32 %v998, %v1030
        %v1039 = vpack.c.bf16 %v1032, %v1031
        %v1040 = vpack.c.bf16 %v1034, %v1033
        %v1041 = vpack.c.bf16 %v1036, %v1035
        %v1042 = vpack.c.bf16 %v1038, %v1037
        %1043 = vrot.lane.b32.xlu0 %v755, 64
        %v1044 = vpop.permute.xlu0 %1043
        %v1046 = vsel %vm950, %v1039, 0
        %v1049 = vsel %vm730, %v1044, 0
        %1051 = vmatprep.subr.bf16.mxu0 0
        %1052 = vmatpush1.bf16.msra.mxu0 %v1049
        %1053 = vmatprep.subr.bf16.mxu0 0
        %1054 = vmatpush1.bf16.msra.mxu0 0
        %1055 = vmatprep.subr.bf16.mxu0 0
        %1056 = vmatpush1.bf16.msra.mxu0 0
        %1057 = vmatprep.subr.bf16.mxu0 0
        %1058 = vmatpush1.bf16.msra.mxu0 0
        %1059 = vmatprep.subr.bf16.mxu0 0
        %1060 = vmatpush1.bf16.msra.mxu0 0
        %1061 = vmatprep.subr.bf16.mxu0 0
        %1062 = vmatpush1.bf16.msra.mxu0 0
        %1063 = vmatprep.subr.bf16.mxu0 0
        %1064 = vmatpush1.bf16.msra.mxu0 0
        %1065 = vmatprep.subr.bf16.mxu0 0
        %1066 = vmatpush1.bf16.msra.mxu0 0
        %1067 = vmatprep.subr.bf16.mxu0 0
        %1068 = vmatpush1.bf16.msra.mxu0 0
        %1069 = vmatprep.subr.bf16.mxu0 0
        %1070 = vmatpush1.bf16.msra.mxu0 0
        %1071 = vmatprep.subr.bf16.mxu0 0
        %1072 = vmatpush1.bf16.msra.mxu0 0
        %1073 = vmatprep.subr.bf16.mxu0 0
        %1074 = vmatpush1.bf16.msra.mxu0 0
        %1075 = vmatprep.subr.bf16.mxu0 0
        %1076 = vmatpush1.bf16.msra.mxu0 0
        %1077 = vmatprep.subr.bf16.mxu0 0
        %1078 = vmatpush1.bf16.msra.mxu0 0
        %1079 = vmatprep.subr.bf16.mxu0 0
        %1080 = vmatpush1.bf16.msra.mxu0 0
        %1081 = vmatprep.subr.bf16.mxu0 0
        %1082 = vmatpush1.bf16.msra.mxu0 0
        %1083 = vmatprep.mubr.bf16.mxu0 0
        %1084 = vmatmul.mubr.bf16.gmra.mrb[0].mxu0 %v1046
        %v1085 = vpop.f32.mrb[0].mxu0
        %v1086 = vadd.f32 0.0, %v1085
        %v1087 = vpop.f32.mrb[0].mxu0
        %v1088 = vpop.f32.mrb[0].mxu0
        %v1089 = vadd.f32 0.0, %v1088
        %v1090 = vpop.f32.mrb[0].mxu0
        %1091 = vdwg.mxu0
        %v1092 = vunpack.c.l.b16 %v758
        %v1093 = vpack.c.b16 %v1092, %v1092
        %1094 = vrot.lane.b32.xlu0 %v1093, 64
        %v1095 = vpop.permute.xlu0 %1094
        %v1097 = vsel %vm950, %v1040, 0
        %v1100 = vsel %vm730, %v1095, 0
        %1102 = vmatprep.subr.bf16.mxu0 0
        %1103 = vmatpush1.bf16.msra.mxu0 %v1100
        %1104 = vmatprep.subr.bf16.mxu0 0
        %1105 = vmatpush1.bf16.msra.mxu0 0
        %1106 = vmatprep.subr.bf16.mxu0 0
        %1107 = vmatpush1.bf16.msra.mxu0 0
        %1108 = vmatprep.subr.bf16.mxu0 0
        %1109 = vmatpush1.bf16.msra.mxu0 0
        %1110 = vmatprep.subr.bf16.mxu0 0
        %1111 = vmatpush1.bf16.msra.mxu0 0
        %1112 = vmatprep.subr.bf16.mxu0 0
        %1113 = vmatpush1.bf16.msra.mxu0 0
        %1114 = vmatprep.subr.bf16.mxu0 0
        %1115 = vmatpush1.bf16.msra.mxu0 0
        %1116 = vmatprep.subr.bf16.mxu0 0
        %1117 = vmatpush1.bf16.msra.mxu0 0
        %1118 = vmatprep.subr.bf16.mxu0 0
        %1119 = vmatpush1.bf16.msra.mxu0 0
        %1120 = vmatprep.subr.bf16.mxu0 0
        %1121 = vmatpush1.bf16.msra.mxu0 0
        %1122 = vmatprep.subr.bf16.mxu0 0
        %1123 = vmatpush1.bf16.msra.mxu0 0
        %1124 = vmatprep.subr.bf16.mxu0 0
        %1125 = vmatpush1.bf16.msra.mxu0 0
        %1126 = vmatprep.subr.bf16.mxu0 0
        %1127 = vmatpush1.bf16.msra.mxu0 0
        %1128 = vmatprep.subr.bf16.mxu0 0
        %1129 = vmatpush1.bf16.msra.mxu0 0
        %1130 = vmatprep.subr.bf16.mxu0 0
        %1131 = vmatpush1.bf16.msra.mxu0 0
        %1132 = vmatprep.subr.bf16.mxu0 0
        %1133 = vmatpush1.bf16.msra.mxu0 0
        %1134 = vmatprep.mubr.bf16.mxu0 0
        %1135 = vmatmul.mubr.bf16.gmra.mrb[0].mxu0 %v1097
        %v1136 = vpop.f32.mrb[0].mxu0
        %v1137 = vadd.f32 0.0, %v1136
        %v1138 = vpop.f32.mrb[0].mxu0
        %v1139 = vpop.f32.mrb[0].mxu0
        %v1140 = vadd.f32 0.0, %v1139
        %v1141 = vpop.f32.mrb[0].mxu0
        %1142 = vdwg.mxu0
        %1143 = vrot.lane.b32.xlu0 %v756, 64
        %v1144 = vpop.permute.xlu0 %1143
        %v1146 = vsel %vm950, %v1041, 0
        %v1149 = vsel %vm730, %v1144, 0
        %1151 = vmatprep.subr.bf16.mxu0 0
        %1152 = vmatpush1.bf16.msra.mxu0 %v1149
        %1153 = vmatprep.subr.bf16.mxu0 0
        %1154 = vmatpush1.bf16.msra.mxu0 0
        %1155 = vmatprep.subr.bf16.mxu0 0
        %1156 = vmatpush1.bf16.msra.mxu0 0
        %1157 = vmatprep.subr.bf16.mxu0 0
        %1158 = vmatpush1.bf16.msra.mxu0 0
        %1159 = vmatprep.subr.bf16.mxu0 0
        %1160 = vmatpush1.bf16.msra.mxu0 0
        %1161 = vmatprep.subr.bf16.mxu0 0
        %1162 = vmatpush1.bf16.msra.mxu0 0
        %1163 = vmatprep.subr.bf16.mxu0 0
        %1164 = vmatpush1.bf16.msra.mxu0 0
        %1165 = vmatprep.subr.bf16.mxu0 0
        %1166 = vmatpush1.bf16.msra.mxu0 0
        %1167 = vmatprep.subr.bf16.mxu0 0
        %1168 = vmatpush1.bf16.msra.mxu0 0
        %1169 = vmatprep.subr.bf16.mxu0 0
        %1170 = vmatpush1.bf16.msra.mxu0 0
        %1171 = vmatprep.subr.bf16.mxu0 0
        %1172 = vmatpush1.bf16.msra.mxu0 0
        %1173 = vmatprep.subr.bf16.mxu0 0
        %1174 = vmatpush1.bf16.msra.mxu0 0
        %1175 = vmatprep.subr.bf16.mxu0 0
        %1176 = vmatpush1.bf16.msra.mxu0 0
        %1177 = vmatprep.subr.bf16.mxu0 0
        %1178 = vmatpush1.bf16.msra.mxu0 0
        %1179 = vmatprep.subr.bf16.mxu0 0
        %1180 = vmatpush1.bf16.msra.mxu0 0
        %1181 = vmatprep.subr.bf16.mxu0 0
        %1182 = vmatpush1.bf16.msra.mxu0 0
        %1183 = vmatprep.mubr.bf16.mxu0 0
        %1184 = vmatmul.mubr.bf16.gmra.mrb[0].mxu0 %v1146
        %v1185 = vpop.f32.mrb[0].mxu0
        %v1186 = vadd.f32 0.0, %v1185
        %v1187 = vpop.f32.mrb[0].mxu0
        %v1188 = vpop.f32.mrb[0].mxu0
        %v1189 = vadd.f32 0.0, %v1188
        %v1190 = vpop.f32.mrb[0].mxu0
        %1191 = vdwg.mxu0
        %v1192 = vunpack.c.l.b16 %v760
        %v1193 = vpack.c.b16 %v1192, %v1192
        %1194 = vrot.lane.b32.xlu0 %v1193, 64
        %v1195 = vpop.permute.xlu0 %1194
        %v1197 = vsel %vm950, %v1042, 0
        %v1200 = vsel %vm730, %v1195, 0
        %1202 = vmatprep.subr.bf16.mxu0 0
        %1203 = vmatpush1.bf16.msra.mxu0 %v1200
        %1204 = vmatprep.subr.bf16.mxu0 0
        %1205 = vmatpush1.bf16.msra.mxu0 0
        %1206 = vmatprep.subr.bf16.mxu0 0
        %1207 = vmatpush1.bf16.msra.mxu0 0
        %1208 = vmatprep.subr.bf16.mxu0 0
        %1209 = vmatpush1.bf16.msra.mxu0 0
        %1210 = vmatprep.subr.bf16.mxu0 0
        %1211 = vmatpush1.bf16.msra.mxu0 0
        %1212 = vmatprep.subr.bf16.mxu0 0
        %1213 = vmatpush1.bf16.msra.mxu0 0
        %1214 = vmatprep.subr.bf16.mxu0 0
        %1215 = vmatpush1.bf16.msra.mxu0 0
        %1216 = vmatprep.subr.bf16.mxu0 0
        %1217 = vmatpush1.bf16.msra.mxu0 0
        %1218 = vmatprep.subr.bf16.mxu0 0
        %1219 = vmatpush1.bf16.msra.mxu0 0
        %1220 = vmatprep.subr.bf16.mxu0 0
        %1221 = vmatpush1.bf16.msra.mxu0 0
        %1222 = vmatprep.subr.bf16.mxu0 0
        %1223 = vmatpush1.bf16.msra.mxu0 0
        %1224 = vmatprep.subr.bf16.mxu0 0
        %1225 = vmatpush1.bf16.msra.mxu0 0
        %1226 = vmatprep.subr.bf16.mxu0 0
        %1227 = vmatpush1.bf16.msra.mxu0 0
        %1228 = vmatprep.subr.bf16.mxu0 0
        %1229 = vmatpush1.bf16.msra.mxu0 0
        %1230 = vmatprep.subr.bf16.mxu0 0
        %1231 = vmatpush1.bf16.msra.mxu0 0
        %1232 = vmatprep.subr.bf16.mxu0 0
        %1233 = vmatpush1.bf16.msra.mxu0 0
        %1234 = vmatprep.mubr.bf16.mxu0 0
        %1235 = vmatmul.mubr.bf16.gmra.mrb[0].mxu0 %v1197
        %v1236 = vpop.f32.mrb[0].mxu0
        %v1237 = vadd.f32 0.0, %v1236
        %v1238 = vpop.f32.mrb[0].mxu0
        %v1239 = vpop.f32.mrb[0].mxu0
        %v1240 = vadd.f32 0.0, %v1239
        %v1241 = vpop.f32.mrb[0].mxu0
        %1242 = vdwg.mxu0
        %v1243 = vld [vmem:[%s526] sm:$0xf]
        %v1244 = vld [vmem:[%s526 + $0x4] sm:$0xf]
        %v1245 = vld [vmem:[%s526 + $0x8] sm:$0xf]
        %v1246 = vld [vmem:[%s526 + $0xc] sm:$0xf]
        %v1247 = vld [vmem:[%s526 + $0x10] sm:$0xf]
        %v1248 = vld [vmem:[%s526 + $0x14] sm:$0xf]
        %v1249 = vld [vmem:[%s526 + $0x18] sm:$0xf]
        %v1250 = vld [vmem:[%s526 + $0x1c] sm:$0xf]
        %v1251 = vpack.c.bf16 %v1186, %v1086
        %v1252 = vpack.c.bf16 %v1189, %v1089
        %v1255 = vunpack.c.l.b16 %v1245
        %v1256 = vunpack.c.l.b16 %v1246
        %v1257 = vpack.c.b16 %v1256, %v1255
        %v1260 = vsel %vm763, %v1252, 0
        %1262 = vmatprep.subr.bf16.mxu0 0
        %1263 = vmatpush1.bf16.msra.mxu0 %v1257
        %1264 = vmatprep.subr.bf16.mxu0 0
        %1265 = vmatpush1.bf16.msra.mxu0 0
        %1266 = vmatprep.subr.bf16.mxu0 0
        %1267 = vmatpush1.bf16.msra.mxu0 0
        %1268 = vmatprep.subr.bf16.mxu0 0
        %1269 = vmatpush1.bf16.msra.mxu0 0
        %1270 = vmatprep.subr.bf16.mxu0 0
        %1271 = vmatpush1.bf16.msra.mxu0 0
        %1272 = vmatprep.subr.bf16.mxu0 0
        %1273 = vmatpush1.bf16.msra.mxu0 0
        %1274 = vmatprep.subr.bf16.mxu0 0
        %1275 = vmatpush1.bf16.msra.mxu0 0
        %1276 = vmatprep.subr.bf16.mxu0 0
        %1277 = vmatpush1.bf16.msra.mxu0 0
        %1278 = vmatprep.subr.bf16.mxu0 0
        %1279 = vmatpush1.bf16.msra.mxu0 0
        %1280 = vmatprep.subr.bf16.mxu0 0
        %1281 = vmatpush1.bf16.msra.mxu0 0
        %1282 = vmatprep.subr.bf16.mxu0 0
        %1283 = vmatpush1.bf16.msra.mxu0 0
        %1284 = vmatprep.subr.bf16.mxu0 0
        %1285 = vmatpush1.bf16.msra.mxu0 0
        %1286 = vmatprep.subr.bf16.mxu0 0
        %1287 = vmatpush1.bf16.msra.mxu0 0
        %1288 = vmatprep.subr.bf16.mxu0 0
        %1289 = vmatpush1.bf16.msra.mxu0 0
        %1290 = vmatprep.subr.bf16.mxu0 0
        %1291 = vmatpush1.bf16.msra.mxu0 0
        %1292 = vmatprep.subr.bf16.mxu0 0
        %1293 = vmatpush1.bf16.msra.mxu0 0
        %1294 = vmatprep.mubr.bf16.mxu0 0
        %1295 = vmatmul.mubr.bf16.gmra.mrb[0].mxu0 %v1260
        %v1296 = vpop.f32.mrb[0].mxu0
        %v1297 = vadd.f32 0.0, %v1296
        %v1298 = vpop.f32.mrb[0].mxu0
        %v1299 = vpop.f32.mrb[0].mxu0
        %v1300 = vadd.f32 0.0, %v1299
        %v1301 = vpop.f32.mrb[0].mxu0
        %1302 = vdwg.mxu0
        %v1305 = vunpack.c.l.b16 %v1243
        %v1306 = vunpack.c.l.b16 %v1244
        %v1307 = vpack.c.b16 %v1306, %v1305
        %v1310 = vsel %vm763, %v1251, 0
        %1312 = vmatprep.subr.bf16.mxu0 0
        %1313 = vmatpush1.bf16.msra.mxu0 %v1307
        %1314 = vmatprep.subr.bf16.mxu0 0
        %1315 = vmatpush1.bf16.msra.mxu0 0
        %1316 = vmatprep.subr.bf16.mxu0 0
        %1317 = vmatpush1.bf16.msra.mxu0 0
        %1318 = vmatprep.subr.bf16.mxu0 0
        %1319 = vmatpush1.bf16.msra.mxu0 0
        %1320 = vmatprep.subr.bf16.mxu0 0
        %1321 = vmatpush1.bf16.msra.mxu0 0
        %1322 = vmatprep.subr.bf16.mxu0 0
        %1323 = vmatpush1.bf16.msra.mxu0 0
        %1324 = vmatprep.subr.bf16.mxu0 0
        %1325 = vmatpush1.bf16.msra.mxu0 0
        %1326 = vmatprep.subr.bf16.mxu0 0
        %1327 = vmatpush1.bf16.msra.mxu0 0
        %1328 = vmatprep.subr.bf16.mxu0 0
        %1329 = vmatpush1.bf16.msra.mxu0 0
        %1330 = vmatprep.subr.bf16.mxu0 0
        %1331 = vmatpush1.bf16.msra.mxu0 0
        %1332 = vmatprep.subr.bf16.mxu0 0
        %1333 = vmatpush1.bf16.msra.mxu0 0
        %1334 = vmatprep.subr.bf16.mxu0 0
        %1335 = vmatpush1.bf16.msra.mxu0 0
        %1336 = vmatprep.subr.bf16.mxu0 0
        %1337 = vmatpush1.bf16.msra.mxu0 0
        %1338 = vmatprep.subr.bf16.mxu0 0
        %1339 = vmatpush1.bf16.msra.mxu0 0
        %1340 = vmatprep.subr.bf16.mxu0 0
        %1341 = vmatpush1.bf16.msra.mxu0 0
        %1342 = vmatprep.subr.bf16.mxu0 0
        %1343 = vmatpush1.bf16.msra.mxu0 0
        %1344 = vmatprep.mubr.bf16.mxu0 0
        %1345 = vmatmul.mubr.bf16.gmra.mrb[0].mxu0 %v1310
        %v1346 = vpop.f32.mrb[0].mxu0
        %v1347 = vadd.f32 %v1297, %v1346
        %v1348 = vpop.f32.mrb[0].mxu0
        %v1349 = vpop.f32.mrb[0].mxu0
        %v1350 = vadd.f32 %v1300, %v1349
        %v1351 = vpop.f32.mrb[0].mxu0
        %1352 = vdwg.mxu0
        %v1353 = vpack.c.bf16 %v1237, %v1137
        %v1356 = vunpack.c.l.b16 %v1247
        %v1357 = vunpack.c.l.b16 %v1248
        %v1358 = vpack.c.b16 %v1357, %v1356
        %v1361 = vsel %vm763, %v1353, 0
        %1363 = vmatprep.subr.bf16.mxu0 0
        %1364 = vmatpush1.bf16.msra.mxu0 %v1358
        %1365 = vmatprep.subr.bf16.mxu0 0
        %1366 = vmatpush1.bf16.msra.mxu0 0
        %1367 = vmatprep.subr.bf16.mxu0 0
        %1368 = vmatpush1.bf16.msra.mxu0 0
        %1369 = vmatprep.subr.bf16.mxu0 0
        %1370 = vmatpush1.bf16.msra.mxu0 0
        %1371 = vmatprep.subr.bf16.mxu0 0
        %1372 = vmatpush1.bf16.msra.mxu0 0
        %1373 = vmatprep.subr.bf16.mxu0 0
        %1374 = vmatpush1.bf16.msra.mxu0 0
        %1375 = vmatprep.subr.bf16.mxu0 0
        %1376 = vmatpush1.bf16.msra.mxu0 0
        %1377 = vmatprep.subr.bf16.mxu0 0
        %1378 = vmatpush1.bf16.msra.mxu0 0
        %1379 = vmatprep.subr.bf16.mxu0 0
        %1380 = vmatpush1.bf16.msra.mxu0 0
        %1381 = vmatprep.subr.bf16.mxu0 0
        %1382 = vmatpush1.bf16.msra.mxu0 0
        %1383 = vmatprep.subr.bf16.mxu0 0
        %1384 = vmatpush1.bf16.msra.mxu0 0
        %1385 = vmatprep.subr.bf16.mxu0 0
        %1386 = vmatpush1.bf16.msra.mxu0 0
        %1387 = vmatprep.subr.bf16.mxu0 0
        %1388 = vmatpush1.bf16.msra.mxu0 0
        %1389 = vmatprep.subr.bf16.mxu0 0
        %1390 = vmatpush1.bf16.msra.mxu0 0
        %1391 = vmatprep.subr.bf16.mxu0 0
        %1392 = vmatpush1.bf16.msra.mxu0 0
        %1393 = vmatprep.subr.bf16.mxu0 0
        %1394 = vmatpush1.bf16.msra.mxu0 0
        %1395 = vmatprep.mubr.bf16.mxu0 0
        %1396 = vmatmul.mubr.bf16.gmra.mrb[0].mxu0 %v1361
        %v1397 = vpop.f32.mrb[0].mxu0
        %v1398 = vadd.f32 0.0, %v1397
        %v1399 = vpop.f32.mrb[0].mxu0
        %v1400 = vpop.f32.mrb[0].mxu0
        %v1401 = vadd.f32 0.0, %v1400
        %v1402 = vpop.f32.mrb[0].mxu0
        %1403 = vdwg.mxu0
        %v1404 = vadd.f32 %v1347, %v1398
        %v1405 = vadd.f32 %v1350, %v1401
        %v1406 = vpack.c.bf16 %v1240, %v1140
        %v1409 = vunpack.c.l.b16 %v1249
        %v1410 = vunpack.c.l.b16 %v1250
        %v1411 = vpack.c.b16 %v1410, %v1409
        %v1414 = vsel %vm763, %v1406, 0
        %1416 = vmatprep.subr.bf16.mxu0 0
        %1417 = vmatpush1.bf16.msra.mxu0 %v1411
        %1418 = vmatprep.subr.bf16.mxu0 0
        %1419 = vmatpush1.bf16.msra.mxu0 0
        %1420 = vmatprep.subr.bf16.mxu0 0
        %1421 = vmatpush1.bf16.msra.mxu0 0
        %1422 = vmatprep.subr.bf16.mxu0 0
        %1423 = vmatpush1.bf16.msra.mxu0 0
        %1424 = vmatprep.subr.bf16.mxu0 0
        %1425 = vmatpush1.bf16.msra.mxu0 0
        %1426 = vmatprep.subr.bf16.mxu0 0
        %1427 = vmatpush1.bf16.msra.mxu0 0
        %1428 = vmatprep.subr.bf16.mxu0 0
        %1429 = vmatpush1.bf16.msra.mxu0 0
        %1430 = vmatprep.subr.bf16.mxu0 0
        %1431 = vmatpush1.bf16.msra.mxu0 0
        %1432 = vmatprep.subr.bf16.mxu0 0
        %1433 = vmatpush1.bf16.msra.mxu0 0
        %1434 = vmatprep.subr.bf16.mxu0 0
        %1435 = vmatpush1.bf16.msra.mxu0 0
        %1436 = vmatprep.subr.bf16.mxu0 0
        %1437 = vmatpush1.bf16.msra.mxu0 0
        %1438 = vmatprep.subr.bf16.mxu0 0
        %1439 = vmatpush1.bf16.msra.mxu0 0
        %1440 = vmatprep.subr.bf16.mxu0 0
        %1441 = vmatpush1.bf16.msra.mxu0 0
        %1442 = vmatprep.subr.bf16.mxu0 0
        %1443 = vmatpush1.bf16.msra.mxu0 0
        %1444 = vmatprep.subr.bf16.mxu0 0
        %1445 = vmatpush1.bf16.msra.mxu0 0
        %1446 = vmatprep.subr.bf16.mxu0 0
        %1447 = vmatpush1.bf16.msra.mxu0 0
        %1448 = vmatprep.mubr.bf16.mxu0 0
        %1449 = vmatmul.mubr.bf16.gmra.mrb[0].mxu0 %v1414
        %v1450 = vpop.f32.mrb[0].mxu0
        %v1451 = vadd.f32 0.0, %v1450
        %v1452 = vpop.f32.mrb[0].mxu0
        %v1453 = vpop.f32.mrb[0].mxu0
        %v1454 = vadd.f32 0.0, %v1453
        %v1455 = vpop.f32.mrb[0].mxu0
        %1456 = vdwg.mxu0
        %v1457 = vadd.f32 %v1404, %v1451
        %v1458 = vadd.f32 %v1405, %v1454
        %v1459 = vadd.f32 %v548, %v1457
        %v1460 = vadd.f32 %v549, %v1458
        %v1461 = vld [vmem:[%s529] sm:$0x1]
        %v1462 = vmul.f32 %v1459, %v1459
        %v1463 = vmul.f32 %v1460, %v1460
        %v1464 = vsel %vm553, %v1462, 0.0
        %1465 = vadd.xlane.f32.xlu0 %v1464
        %v1466 = vpop.xlane.xlu0 %1465
        %v1467 = vsel %vm553, %v1463, 0.0
        %1468 = vadd.xlane.f32.xlu0 %v1467
        %v1469 = vpop.xlane.xlu0 %1468
        %v1470 = vmul.f32 %v1466, %v560
        %v1471 = vmul.f32 %v1469, %v560
        %v1472 = vadd.f32 %v1470, 1e-05
        %v1473 = vadd.f32 %v1471, 1e-05
        %v1474 = vrsqrt.pop %v1472
        %v1475 = vrsqrt.pop %v1473
        %v1476 = vmul.f32 %v1459, %v1474
        %v1477 = vmul.f32 %v1460, %v1475
        %v1479 = vlaneseq
        %v1480 = vshrl.u32 %v1479, 7
        %v1481 = vsub.s32 0, %v1480
        %v1482 = vrot.slane %v1461, %v1481
        %v1484 = vmul.f32 %v1476, %v1482
        %v1485 = vmul.f32 %v1477, %v1482
        %v1486 = vpack.c.bf16 %v1485, %v1484
        %v1487 = vld [vmem:[%s457] sm:$0xff]
        %v1488 = vld [vmem:[%s457 + $0x8] sm:$0xff]
        %v1489 = vld [vmem:[%s457 + $0x10] sm:$0xff]
        %v1490 = vld [vmem:[%s457 + $0x18] sm:$0xff]
        %v1491 = vld [vmem:[%s457 + $0x20] sm:$0xff]
        %v1492 = vld [vmem:[%s457 + $0x28] sm:$0xff]
        %v1493 = vld [vmem:[%s457 + $0x30] sm:$0xff]
        %v1494 = vld [vmem:[%s457 + $0x38] sm:$0xff]
        %v1503 = vunpack.c.l.b16 %v1487
        %v1504 = vunpack.c.h.b16 %v1487
        %v1505 = vunpack.c.l.b16 %v1488
        %v1506 = vunpack.c.h.b16 %v1488
        %v1507 = vunpack.c.l.b16 %v1489
        %v1508 = vunpack.c.h.b16 %v1489
        %v1509 = vunpack.c.l.b16 %v1490
        %v1510 = vunpack.c.h.b16 %v1490
        %v1511 = vunpack.c.l.b16 %v1491
        %v1512 = vunpack.c.h.b16 %v1491
        %v1513 = vunpack.c.l.b16 %v1492
        %v1514 = vunpack.c.h.b16 %v1492
        %v1515 = vunpack.c.l.b16 %v1493
        %v1516 = vunpack.c.h.b16 %v1493
        %v1517 = vunpack.c.l.b16 %v1494
        %v1518 = vunpack.c.h.b16 %v1494
        %v1519 = vpack.c.b16 %v1505, %v1503
        %v1520 = vpack.c.b16 %v1506, %v1504
        %v1521 = vpack.c.b16 %v1509, %v1507
        %v1522 = vpack.c.b16 %v1510, %v1508
        %v1523 = vpack.c.b16 %v1513, %v1511
        %v1524 = vpack.c.b16 %v1514, %v1512
        %v1525 = vpack.c.b16 %v1517, %v1515
        %v1526 = vpack.c.b16 %v1518, %v1516
        %v1536 = vsel %vm553, %v1486, 0
        %1538 = vmatprep.subr.bf16.mxu0 %v1520
        %1539 = vmatpush1.bf16.msra.mxu0 %v1519
        %1540 = vmatprep.subr.bf16.mxu0 %v1522
        %1541 = vmatpush1.bf16.msra.mxu0 %v1521
        %1542 = vmatprep.subr.bf16.mxu0 %v1524
        %1543 = vmatpush1.bf16.msra.mxu0 %v1523
        %1544 = vmatprep.subr.bf16.mxu0 %v1526
        %1545 = vmatpush1.bf16.msra.mxu0 %v1525
        %1546 = vmatprep.subr.bf16.mxu0 0
        %1547 = vmatpush1.bf16.msra.mxu0 0
        %1548 = vmatprep.subr.bf16.mxu0 0
        %1549 = vmatpush1.bf16.msra.mxu0 0
        %1550 = vmatprep.subr.bf16.mxu0 0
        %1551 = vmatpush1.bf16.msra.mxu0 0
        %1552 = vmatprep.subr.bf16.mxu0 0
        %1553 = vmatpush1.bf16.msra.mxu0 0
        %1554 = vmatprep.subr.bf16.mxu0 0
        %1555 = vmatpush1.bf16.msra.mxu0 0
        %1556 = vmatprep.subr.bf16.mxu0 0
        %1557 = vmatpush1.bf16.msra.mxu0 0
        %1558 = vmatprep.subr.bf16.mxu0 0
        %1559 = vmatpush1.bf16.msra.mxu0 0
        %1560 = vmatprep.subr.bf16.mxu0 0
        %1561 = vmatpush1.bf16.msra.mxu0 0
        %1562 = vmatprep.subr.bf16.mxu0 0
        %1563 = vmatpush1.bf16.msra.mxu0 0
        %1564 = vmatprep.subr.bf16.mxu0 0
        %1565 = vmatpush1.bf16.msra.mxu0 0
        %1566 = vmatprep.subr.bf16.mxu0 0
        %1567 = vmatpush1.bf16.msra.mxu0 0
        %1568 = vmatprep.subr.bf16.mxu0 0
        %1569 = vmatpush1.bf16.msra.mxu0 0
        %1570 = vmatprep.mubr.bf16.mxu0 0
        %1571 = vmatmul.mubr.bf16.gmra.mrb[0].mxu0 %v1536
        %v1572 = vpop.f32.mrb[0].mxu0
        %v1573 = vadd.f32 0.0, %v1572
        %v1574 = vpop.f32.mrb[0].mxu0
        %v1575 = vadd.f32 0.0, %v1574
        %v1576 = vpop.f32.mrb[0].mxu0
        %v1577 = vadd.f32 0.0, %v1576
        %v1578 = vpop.f32.mrb[0].mxu0
        %v1579 = vadd.f32 0.0, %v1578
        %1580 = vdwg.mxu0
        %v1581 = vpack.c.bf16 %v1577, %v1573
        %v1582 = vpack.c.bf16 %v1579, %v1575
        %v1583 = vxor.u32 %v1581, 2147516416
        %v1585 = vmul.bf16 %v1583, 1069105081
        %v1586 = vpow.bf16.pop %v1585
        %v1587 = vadd.bf16 %v1586, 1065369472
        %v1588 = vrcp.bf16.pop %v1587
        %v1589 = vmul.bf16 1065369472, %v1588
        %v1590 = vmul.bf16 %v1581, %v1589
        %v1591 = vmul.bf16 %v1590, %v1582
        %v1592 = vld [vmem:[%s534] sm:$0xf]
        %v1593 = vld [vmem:[%s534 + $0x4] sm:$0xf]
        %v1594 = vld [vmem:[%s534 + $0x8] sm:$0xf]
        %v1595 = vld [vmem:[%s534 + $0xc] sm:$0xf]
        %v1596 = vld [vmem:[%s534 + $0x10] sm:$0xf]
        %v1597 = vld [vmem:[%s534 + $0x14] sm:$0xf]
        %v1598 = vld [vmem:[%s534 + $0x18] sm:$0xf]
        %v1599 = vld [vmem:[%s534 + $0x1c] sm:$0xf]
        %v1600 = vld [vmem:[%s534 + $0x20] sm:$0xf]
        %v1601 = vld [vmem:[%s534 + $0x24] sm:$0xf]
        %v1602 = vld [vmem:[%s534 + $0x28] sm:$0xf]
        %v1603 = vld [vmem:[%s534 + $0x2c] sm:$0xf]
        %v1604 = vld [vmem:[%s534 + $0x30] sm:$0xf]
        %v1605 = vld [vmem:[%s534 + $0x34] sm:$0xf]
        %v1606 = vld [vmem:[%s534 + $0x38] sm:$0xf]
        %v1607 = vld [vmem:[%s534 + $0x3c] sm:$0xf]
        %v1624 = vunpack.c.l.b16 %v1592
        %v1625 = vunpack.c.l.b16 %v1593
        %v1626 = vunpack.c.l.b16 %v1594
        %v1627 = vunpack.c.l.b16 %v1595
        %v1628 = vunpack.c.l.b16 %v1596
        %v1629 = vunpack.c.l.b16 %v1597
        %v1630 = vunpack.c.l.b16 %v1598
        %v1631 = vunpack.c.l.b16 %v1599
        %v1632 = vunpack.c.l.b16 %v1600
        %v1633 = vunpack.c.l.b16 %v1601
        %v1634 = vunpack.c.l.b16 %v1602
        %v1635 = vunpack.c.l.b16 %v1603
        %v1636 = vunpack.c.l.b16 %v1604
        %v1637 = vunpack.c.l.b16 %v1605
        %v1638 = vunpack.c.l.b16 %v1606
        %v1639 = vunpack.c.l.b16 %v1607
        %v1640 = vpack.c.b16 %v1625, %v1624
        %v1641 = vpack.c.b16 %v1627, %v1626
        %v1642 = vpack.c.b16 %v1629, %v1628
        %v1643 = vpack.c.b16 %v1631, %v1630
        %v1644 = vpack.c.b16 %v1633, %v1632
        %v1645 = vpack.c.b16 %v1635, %v1634
        %v1646 = vpack.c.b16 %v1637, %v1636
        %v1647 = vpack.c.b16 %v1639, %v1638
        %1656 = vmatprep.subr.bf16.mxu0 0
        %1657 = vmatpush1.bf16.msra.mxu0 %v1640
        %1658 = vmatprep.subr.bf16.mxu0 0
        %1659 = vmatpush1.bf16.msra.mxu0 %v1641
        %1660 = vmatprep.subr.bf16.mxu0 0
        %1661 = vmatpush1.bf16.msra.mxu0 %v1642
        %1662 = vmatprep.subr.bf16.mxu0 0
        %1663 = vmatpush1.bf16.msra.mxu0 %v1643
        %1664 = vmatprep.subr.bf16.mxu0 0
        %1665 = vmatpush1.bf16.msra.mxu0 %v1644
        %1666 = vmatprep.subr.bf16.mxu0 0
        %1667 = vmatpush1.bf16.msra.mxu0 %v1645
        %1668 = vmatprep.subr.bf16.mxu0 0
        %1669 = vmatpush1.bf16.msra.mxu0 %v1646
        %1670 = vmatprep.subr.bf16.mxu0 0
        %1671 = vmatpush1.bf16.msra.mxu0 %v1647
        %1672 = vmatprep.subr.bf16.mxu0 0
        %1673 = vmatpush1.bf16.msra.mxu0 0
        %1674 = vmatprep.subr.bf16.mxu0 0
        %1675 = vmatpush1.bf16.msra.mxu0 0
        %1676 = vmatprep.subr.bf16.mxu0 0
        %1677 = vmatpush1.bf16.msra.mxu0 0
        %1678 = vmatprep.subr.bf16.mxu0 0
        %1679 = vmatpush1.bf16.msra.mxu0 0
        %1680 = vmatprep.subr.bf16.mxu0 0
        %1681 = vmatpush1.bf16.msra.mxu0 0
        %1682 = vmatprep.subr.bf16.mxu0 0
        %1683 = vmatpush1.bf16.msra.mxu0 0
        %1684 = vmatprep.subr.bf16.mxu0 0
        %1685 = vmatpush1.bf16.msra.mxu0 0
        %1686 = vmatprep.subr.bf16.mxu0 0
        %1687 = vmatpush1.bf16.msra.mxu0 0
        %1688 = vmatprep.mubr.bf16.mxu0 0
        %1689 = vmatmul.mubr.bf16.gmra.mrb[0].mxu0 %v1591
        %v1690 = vpop.f32.mrb[0].mxu0
        %v1691 = vadd.f32 0.0, %v1690
        %v1692 = vpop.f32.mrb[0].mxu0
        %v1693 = vpop.f32.mrb[0].mxu0
        %v1694 = vadd.f32 0.0, %v1693
        %v1695 = vpop.f32.mrb[0].mxu0
        %1696 = vdwg.mxu0
        %v1697 = vadd.f32 %v1459, %v1691
        %v1698 = vadd.f32 %v1460, %v1694
        %1699 = vst.msk [vmem:[#allocation2] sm:$0xff] %vm553, %v1697
        %1700 = vst.msk [vmem:[#allocation2 + $0x8] sm:$0xff] %vm553, %v1698
        %p1701 = scmp.eq.s32.totalorder %s26, 1
        // Predicated region
        $region85: #{tpu_custom_call.1} parent=67 // pred_check
          %p1702 = pneg %p1701
        $region86: #{tpu_custom_call.1} parent=67 // pred_check_branch
          %1704 = sbr.rel (%p1702) target = $region88
        $region87: #{tpu_custom_call.1} parent=67 // pred_region
          %v1705 = vld [vmem:[%s10] sm:$0x1]
          %v1706 = vmul.f32 %v1697, %v1697
          %v1707 = vmul.f32 %v1698, %v1698
          %v1708 = vsel %vm553, %v1706, 0.0
          %1709 = vadd.xlane.f32.xlu0 %v1708
          %v1710 = vpop.xlane.xlu0 %1709
          %v1711 = vsel %vm553, %v1707, 0.0
          %1712 = vadd.xlane.f32.xlu0 %v1711
          %v1713 = vpop.xlane.xlu0 %1712
          %v1714 = vmul.f32 %v1710, %v560
          %v1715 = vmul.f32 %v1713, %v560
          %v1716 = vadd.f32 %v1714, 1e-05
          %v1717 = vadd.f32 %v1715, 1e-05
          %v1718 = vrsqrt.pop %v1716
          %v1719 = vrsqrt.pop %v1717
          %v1720 = vmul.f32 %v1697, %v1718
          %v1721 = vmul.f32 %v1698, %v1719
          %v1723 = vlaneseq
          %v1724 = vshrl.u32 %v1723, 7
          %v1725 = vsub.s32 0, %v1724
          %v1726 = vrot.slane %v1705, %v1725
          %v1728 = vmul.f32 %v1720, %v1726
          %v1729 = vmul.f32 %v1721, %v1726
          %v1730 = vpack.c.bf16 %v1729, %v1728
          %v1731 = vld [vmem:[%s11] sm:$0xf]
          %v1732 = vld [vmem:[%s11 + $0x4] sm:$0xf]
          %v1733 = vld [vmem:[%s11 + $0x8] sm:$0xf]
          %v1734 = vld [vmem:[%s11 + $0xc] sm:$0xf]
          %v1735 = vld [vmem:[%s11 + $0x10] sm:$0xf]
          %v1736 = vld [vmem:[%s11 + $0x14] sm:$0xf]
          %v1737 = vld [vmem:[%s11 + $0x18] sm:$0xf]
          %v1738 = vld [vmem:[%s11 + $0x1c] sm:$0xf]
          %v1747 = vunpack.c.l.b16 %v1731
          %v1748 = vunpack.c.l.b16 %v1732
          %v1749 = vunpack.c.l.b16 %v1733
          %v1750 = vunpack.c.l.b16 %v1734
          %v1751 = vunpack.c.l.b16 %v1735
          %v1752 = vunpack.c.l.b16 %v1736
          %v1753 = vunpack.c.l.b16 %v1737
          %v1754 = vunpack.c.l.b16 %v1738
          %v1755 = vpack.c.b16 %v1748, %v1747
          %v1756 = vpack.c.b16 %v1750, %v1749
          %v1757 = vpack.c.b16 %v1752, %v1751
          %v1758 = vpack.c.b16 %v1754, %v1753
          %v1764 = vsel %vm553, %v1730, 0
          %1766 = vmatprep.subr.bf16.mxu0 0
          %1767 = vmatpush1.bf16.msra.mxu0 %v1755
          %1768 = vmatprep.subr.bf16.mxu0 0
          %1769 = vmatpush1.bf16.msra.mxu0 %v1756
          %1770 = vmatprep.subr.bf16.mxu0 0
          %1771 = vmatpush1.bf16.msra.mxu0 %v1757
          %1772 = vmatprep.subr.bf16.mxu0 0
          %1773 = vmatpush1.bf16.msra.mxu0 %v1758
          %1774 = vmatprep.subr.bf16.mxu0 0
          %1775 = vmatpush1.bf16.msra.mxu0 0
          %1776 = vmatprep.subr.bf16.mxu0 0
          %1777 = vmatpush1.bf16.msra.mxu0 0
          %1778 = vmatprep.subr.bf16.mxu0 0
          %1779 = vmatpush1.bf16.msra.mxu0 0
          %1780 = vmatprep.subr.bf16.mxu0 0
          %1781 = vmatpush1.bf16.msra.mxu0 0
          %1782 = vmatprep.subr.bf16.mxu0 0
          %1783 = vmatpush1.bf16.msra.mxu0 0
          %1784 = vmatprep.subr.bf16.mxu0 0
          %1785 = vmatpush1.bf16.msra.mxu0 0
          %1786 = vmatprep.subr.bf16.mxu0 0
          %1787 = vmatpush1.bf16.msra.mxu0 0
          %1788 = vmatprep.subr.bf16.mxu0 0
          %1789 = vmatpush1.bf16.msra.mxu0 0
          %1790 = vmatprep.subr.bf16.mxu0 0
          %1791 = vmatpush1.bf16.msra.mxu0 0
          %1792 = vmatprep.subr.bf16.mxu0 0
          %1793 = vmatpush1.bf16.msra.mxu0 0
          %1794 = vmatprep.subr.bf16.mxu0 0
          %1795 = vmatpush1.bf16.msra.mxu0 0
          %1796 = vmatprep.subr.bf16.mxu0 0
          %1797 = vmatpush1.bf16.msra.mxu0 0
          %1798 = vmatprep.mubr.bf16.mxu0 0
          %1799 = vmatmul.mubr.bf16.gmra.mrb[0].mxu0 %v1764
          %v1800 = vpop.f32.mrb[0].mxu0
          %v1801 = vadd.f32 0.0, %v1800
          %v1802 = vpop.f32.mrb[0].mxu0
          %v1803 = vpop.f32.mrb[0].mxu0
          %v1804 = vadd.f32 0.0, %v1803
          %v1805 = vpop.f32.mrb[0].mxu0
          %1806 = vdwg.mxu0
          %v1807 = vpack.c.bf16 %v1804, %v1801
          %v1809 = vunpack.c.l.b16 %v1807
          %v1810 = vunpack.c.h.b16 %v1807
          %v1811 = vpack.c.b16 %v1809, %v1809
          %v1812 = vpack.c.b16 %v1810, %v1810
          %1815 = vst [vmem:[#allocation9] sm:$0xf] %v1811
          %1816 = vst [vmem:[#allocation9 + $0x4] sm:$0xf] %v1812
        $region88: #{tpu_custom_call.1} parent=67 // pred_fallthru
          _
        // Predicated region
        $region89: #{tpu_custom_call.1} parent=67 // pred_check
          %p1817 = pneg %p321
        $region90: #{tpu_custom_call.1} parent=67 // pred_check_branch
          %1819 = sbr.rel (%p1817) target = $region92
        $region91: #{tpu_custom_call.1} parent=67 // pred_region
          %s1821 = ssub.s32 128, 128
          %1822 = vsyncadd [#allocation5], %s1821
          %s1823 = sshll.u32 [#allocation9], 4
          %s1824 = int_to_ptr.vmem [resolvable:$true] %s1823
          %1829 = dma.vmem_to_hbm [thread:$0]  %s1824, 128, %s12, [#allocation5], 64, 64, 4
        $region92: #{tpu_custom_call.1} parent=67 // pred_fallthru
          _
        // Predicated region
        $region93: #{tpu_custom_call.1} parent=67 // pred_check
          %p1830 = pneg %p321
        $region94: #{tpu_custom_call.1} parent=67 // pred_check_branch
          %1832 = sbr.rel (%p1830) target = $region96
        $region95: #{tpu_custom_call.1} parent=67 // pred_region
          %1833 = dma.done [#allocation5], 128
        $region96: #{tpu_custom_call.1} parent=67 // pred_fallthru
          _
      $region68: #{tpu_custom_call.1} parent=5 // pred_fallthru
        _
      %p1834 = scmp.le.s32.totalorder 2, %s21
      // Predicated region
      $region97: #{tpu_custom_call.1} parent=5 // pred_check
        %p1835 = pneg %p1834
      $region98: #{tpu_custom_call.1} parent=5 // pred_check_branch
        %1837 = sbr.rel (%p1835) target = $region100
      $region99: #{tpu_custom_call.1} parent=5 // pred_region
        %s1838 = ssub.s32 %s21, 2
      $region100: #{tpu_custom_call.1} parent=5 // pred_fallthru
        _
    $region6: #{tpu_custom_call.1} parent=1 // loop_footer
      %s25 = sadd.s32 1, %s21
    $region7: #{tpu_custom_call.1} parent=1 // loop_footer_branch
      %20 = sbr.rel target = $region3
    $region8: #{tpu_custom_call.1} parent=1 // loop_exit
      _
    %1839 = vsyncpa [#allocation4], 1
    %s1840 = scalar_lea.sflag [#allocation4], 1
    %1841 = vsyncpa %s1840, 1
    %1842 = vsyncpa [#allocation7], 1
    %1843 = vsyncpa [#allocation5], 1
    %s1844 = scalar_lea.sflag [#allocation5], 1
    %1845 = vsyncpa %s1844, 1

</llo_original>
